<compile_context>
chip_gen: v7x
topology: tpu7x:2x2x1
jax: 0.10.0
libtpu: 0.0.40
codegen_flags: <defaults>
</compile_context>

<pallas_src>
import functools

import jax
import jax.numpy as jnp
from jax.experimental import pallas as pl
from jax.experimental.pallas import tpu as pltpu

# ----------------------------- configuration --------------------------------
B, L = 2, 8
UNIGRAM_SIZE = 16
BIGRAM_SIZE = 16
WORD_SIZE = 16
PINYIN_SIZE = 16
LEX_W = 4                        # lexicon_window_size == max_matched_lexcons
N_BMES = 4                       # group_num = 3 -> {'B','M','E','[UNK]'}
H = UNIGRAM_SIZE + BIGRAM_SIZE   # LSTM input size == hidden size (32)
DC = N_BMES + WORD_SIZE + PINYIN_SIZE   # lexicon feature size (36)
DC_PAD = 64                      # lexicon feature size zero-padded for alignment
UNIGRAM_VOCAB = 50
PINYIN_VOCAB = 30
HIDDEN_OUT = H + DC              # == module.hidden_size (68)
N_TOK = B * L


# ------------------------------ fused kernel --------------------------------
def fused_encoder_kernel(gram_ref, k_ref, mask_ref, wih_ref, whh_ref, b_ref,
                         wp_ref, bp_ref, out_ref):
    """Fused encoder: BiLSTM (fwd+bwd per step) + lexicon attention + concat.

    gram_ref : (B, L, H)            unigram+bigram embeddings, batch-first
    k_ref    : (LEX_W*B*L, DC_PAD)  lexicon features, window-major, zero padded
    mask_ref : (B*L, LEX_W)         lexicon attention mask (1 valid / 0 pad)
    wih_ref  : (H, 8H)              [W_ih_fwd^T | W_ih_bwd^T]
    whh_ref  : (H, 8H)              [W_hh_fwd^T | W_hh_bwd^T]
    b_ref    : (1, 8H)              [b_ih_fwd+b_hh_fwd | b_ih_bwd+b_hh_bwd]
    wp_ref   : (DC_PAD, H)          lexicon->gram Linear weight^T, zero-padded rows
    bp_ref   : (1, H)               Linear bias
    out_ref  : (B*L, H + DC)        [gram_hidden | attention_output]
    """
    gram = gram_ref[...]            # (B, L, H)
    wih = wih_ref[...]              # (H, 8H)
    whh = whh_ref[...]              # (H, 8H)
    bias = b_ref[...]               # (1, 8H)

    # Rows 0..B-1 of the stacked state carry the forward direction, rows B..2B-1
    # the backward one; both directions share one (2B,H)x(H,8H) matmul per step
    # (256-lane-wide gate output fills the MXU better than 4H=128).
    is_fwd = jax.lax.broadcasted_iota(jnp.int32, (2 * B, 4 * H), 0) < B

    h = jnp.zeros((2 * B, H), jnp.float32)
    c = jnp.zeros((2 * B, H), jnp.float32)
    hs = []
    for t in range(L):              # statically unrolled serial recurrence
        x = jnp.concatenate([gram[:, t, :], gram[:, L - 1 - t, :]], axis=0)
        gates8 = (jnp.dot(x, wih, preferred_element_type=jnp.float32)
                  + jnp.dot(h, whh, preferred_element_type=jnp.float32)
                  + bias)                                        # (2B, 8H)
        gates = jnp.where(is_fwd, gates8[:, :4 * H], gates8[:, 4 * H:])  # (2B,4H)
        i_g = jax.nn.sigmoid(gates[:, 0 * H:1 * H])
        f_g = jax.nn.sigmoid(gates[:, 1 * H:2 * H])
        g_g = jnp.tanh(gates[:, 2 * H:3 * H])
        o_g = jax.nn.sigmoid(gates[:, 3 * H:4 * H])
        c = f_g * c + i_g * g_g
        h = o_g * jnp.tanh(c)
        hs.append(h)

    # gram_hidden row (b, t) = h_fwd(pos t) + h_bwd(pos t); the backward hidden
    # for original position t was produced at loop step L-1-t.  Row order is
    # b-major to match the (B, L) flatten used for the lexicon features/mask.
    q_rows = []
    for b in range(B):
        for t in range(L):
            q_rows.append(hs[t][b:b + 1, :] + hs[L - 1 - t][B + b:B + b + 1, :])
    q = jnp.concatenate(q_rows, axis=0)                          # (B*L, H)

    # ---- lexicon attention: project keys, masked softmax, weighted sum of raw keys
    k_flat = k_ref[...]                                          # (W*N, DC_PAD)
    wp = wp_ref[...]                                             # (DC_PAD, H)
    bp = bp_ref[...]                                             # (1, H)
    mask = mask_ref[...]                                         # (N, W)

    kp = jnp.dot(k_flat, wp, preferred_element_type=jnp.float32) + bp   # (W*N, H)

    s_list = []
    for w_i in range(LEX_W):
        kp_w = kp[w_i * N_TOK:(w_i + 1) * N_TOK, :]              # (N, H)
        s_w = jnp.sum(kp_w * q, axis=-1, keepdims=True)          # (N, 1)
        m_w = mask[:, w_i:w_i + 1]                               # (N, 1)
        s_list.append(jnp.where(m_w > 0.0, s_w, jnp.float32(-1e9)))
    s_max = functools.reduce(jnp.maximum, s_list)                # (N, 1)
    e_list = [jnp.exp(s - s_max) for s in s_list]
    inv_denom = pl.reciprocal(functools.reduce(jnp.add, e_list), approx=True)

    att = jnp.zeros((N_TOK, DC_PAD), jnp.float32)
    for w_i in range(LEX_W):
        k_w = k_flat[w_i * N_TOK:(w_i + 1) * N_TOK, :]           # (N, DC_PAD)
        att = att + (e_list[w_i] * inv_denom) * k_w              # un-projected keys

    # fused final concat: [gram_hidden | attention_output]
    out_ref[:, 0:H] = q
    out_ref[:, H:HIDDEN_OUT] = att[:, 0:DC]


def run_fused_encoder(gram, k_wmaj, mask2d, wih_cat, whh_cat, b_cat, wp_t, bp):
    vmem = pl.BlockSpec(memory_space=pltpu.MemorySpace.VMEM)
    # TODO(synk): if B*L / LEX_W / DC ever scale up, grid this over ~128-512 token
    # tiles ("parallel") instead of whole-array VMEM blocks (v7x VMEM budget).
    return pl.pallas_call(
        fused_encoder_kernel,
        out_shape=jax.ShapeDtypeStruct((N_TOK, HIDDEN_OUT), jnp.float32),
        in_specs=[vmem] * 8,
        out_specs=vmem,
    )(gram, k_wmaj, mask2d, wih_cat, whh_cat, b_cat, wp_t, bp)


# ------------------------------ full forward ---------------------------------
@jax.jit
def forward(params, seqs_unigram_ids, seqs_lexicon_embed, seqs_pinyin_ids,
            seqs_lexicon_bmes_ids, seqs_bigram_embed, att_lexicon_mask,
            att_unigram_mask):
    # --- embedding lookups / feature construction (XLA glue: gathers + concats) ---
    uni = jnp.take(params['unigram_emb'], seqs_unigram_ids, axis=0)      # (B,L,U)
    gram = jnp.concatenate([uni, seqs_bigram_embed], axis=-1)            # (B,L,H)

    bmes_oh = jax.nn.one_hot(seqs_lexicon_bmes_ids, N_BMES, dtype=jnp.float32)
    pin = jnp.take(params['pinyin_emb'], seqs_pinyin_ids, axis=0)        # (B,L,W,P)
    cat_embed = jnp.concatenate([bmes_oh, seqs_lexicon_embed, pin],
                                axis=-1)                                 # (B,L,W,DC)
    cat_embed = jnp.pad(cat_embed,
                        ((0, 0), (0, 0), (0, 0), (0, DC_PAD - DC)))      # (B,L,W,DCp)
    # window-major layout -> per-window key blocks are static contiguous slices
    k_wmaj = jnp.transpose(cat_embed, (2, 0, 1, 3)).reshape(LEX_W * N_TOK, DC_PAD)
    mask2d = att_lexicon_mask.reshape(N_TOK, LEX_W).astype(jnp.float32)

    # TODO(synk): compress_seq=True pack_padded_sequence semantics are not
    # replicated; this matches the compress_seq=False path (identical when all
    # sequences are full length), so att_unigram_mask is unused here.
    out2d = run_fused_encoder(gram, k_wmaj, mask2d,
                              params['wih_cat'], params['whh_cat'],
                              params['b_cat'], params['wp_t'], params['bp'])
    return out2d.reshape(B, L, HIDDEN_OUT)                               # (B,L,H+DC)


# ------------------------------ parameter init --------------------------------
def init_params(key):
    keys = jax.random.split(key, 8)
    scale = 0.1

    unigram_emb = scale * jax.random.normal(keys[0], (UNIGRAM_VOCAB, UNIGRAM_SIZE),
                                            jnp.float32)
    unigram_emb = unigram_emb.at[0].set(0.0)      # padding_idx row = 0
    pinyin_emb = scale * jax.random.normal(keys[1], (PINYIN_VOCAB, PINYIN_SIZE),
                                           jnp.float32)
    pinyin_emb = pinyin_emb.at[0].set(0.0)        # padding_idx row = 0

    # bidirectional LSTM params, PyTorch gate order (i, f, g, o)
    w_ih = scale * jax.random.normal(keys[2], (2, 4 * H, H), jnp.float32)
    w_hh = scale * jax.random.normal(keys[3], (2, 4 * H, H), jnp.float32)
    b_ih = scale * jax.random.normal(keys[4], (2, 4 * H), jnp.float32)
    b_hh = scale * jax.random.normal(keys[5], (2, 4 * H), jnp.float32)

    # bmes_lexicon_pinyin2gram: nn.Linear(DC, H)  -> weight (H, DC), bias (H,)
    wp = scale * jax.random.normal(keys[6], (H, DC), jnp.float32)
    bp = scale * jax.random.normal(keys[7], (H,), jnp.float32)

    params = {
        'unigram_emb': unigram_emb,
        'pinyin_emb': pinyin_emb,
        # fused direction weights: one (2B,H)x(H,8H) matmul per step does fwd+bwd
        'wih_cat': jnp.concatenate([w_ih[0].T, w_ih[1].T], axis=1),      # (H, 8H)
        'whh_cat': jnp.concatenate([w_hh[0].T, w_hh[1].T], axis=1),      # (H, 8H)
        'b_cat': jnp.concatenate([b_ih[0] + b_hh[0],
                                  b_ih[1] + b_hh[1]])[None, :],          # (1, 8H)
        'wp_t': jnp.pad(wp.T, ((0, DC_PAD - DC), (0, 0))),               # (DCp, H)
        'bp': bp[None, :],                                               # (1, H)
    }
    raw = {'unigram_emb': unigram_emb, 'pinyin_emb': pinyin_emb,
           'w_ih': w_ih, 'w_hh': w_hh, 'b_ih': b_ih, 'b_hh': b_hh,
           'wp': wp, 'bp': bp}
    return params, raw


# --------------------------- pure-JAX reference --------------------------------
def reference_forward(raw, seqs_unigram_ids, seqs_lexicon_embed, seqs_pinyin_ids,
                      seqs_lexicon_bmes_ids, seqs_bigram_embed, att_lexicon_mask):
    uni = jnp.take(raw['unigram_emb'], seqs_unigram_ids, axis=0)
    gram = jnp.concatenate([uni, seqs_bigram_embed], axis=-1)            # (B,L,H)

    def run_dir(d, xs):                 # xs: (T, B, H) in processing order
        def step(carry, x):
            h, c = carry
            gates = (x @ raw['w_ih'][d].T + h @ raw['w_hh'][d].T
                     + raw['b_ih'][d] + raw['b_hh'][d])
            i = jax.nn.sigmoid(gates[:, 0 * H:1 * H])
            f = jax.nn.sigmoid(gates[:, 1 * H:2 * H])
            g = jnp.tanh(gates[:, 2 * H:3 * H])
            o = jax.nn.sigmoid(gates[:, 3 * H:4 * H])
            c = f * c + i * g
            h = o * jnp.tanh(c)
            return (h, c), h
        init = (jnp.zeros((B, H), jnp.float32), jnp.zeros((B, H), jnp.float32))
        _, hs = jax.lax.scan(step, init, xs)
        return hs                        # (T, B, H)

    xs = jnp.transpose(gram, (1, 0, 2))
    h_f = run_dir(0, xs)
    h_b = run_dir(1, xs[::-1])[::-1]
    gram_hidden = jnp.transpose(h_f + h_b, (1, 0, 2))                    # (B,L,H)

    bmes_oh = jax.nn.one_hot(seqs_lexicon_bmes_ids, N_BMES, dtype=jnp.float32)
    pin = jnp.take(raw['pinyin_emb'], seqs_pinyin_ids, axis=0)
    cat = jnp.concatenate([bmes_oh, seqs_lexicon_embed, pin], axis=-1)   # (B,L,W,DC)
    kp = jnp.einsum('blwd,hd->blwh', cat, raw['wp']) + raw['bp']
    scores = jnp.sum(kp * gram_hidden[:, :, None, :], axis=-1)
    scores = jnp.where(att_lexicon_mask > 0, scores, jnp.float32(-1e9))
    wts = jax.nn.softmax(scores, axis=-1)
    att = jnp.sum(wts[..., None] * cat, axis=2)
    return jnp.concatenate([gram_hidden, att], axis=-1)


# --------------------------------- main ---------------------------------------
if __name__ == "__main__":
    root = jax.random.PRNGKey(0)
    kp_, k1, k2, k3, k4, k5, k6 = jax.random.split(root, 7)

    params, raw = init_params(kp_)

    seqs_unigram_ids = jax.random.randint(k1, (B, L), 1, UNIGRAM_VOCAB,
                                          dtype=jnp.int32)
    seqs_bigram_embed = jax.random.normal(k2, (B, L, BIGRAM_SIZE), jnp.float32)
    seqs_lexicon_embed = jax.random.normal(k3, (B, L, LEX_W, WORD_SIZE),
                                           jnp.float32)
    seqs_pinyin_ids = jax.random.randint(k4, (B, L, LEX_W), 0, PINYIN_VOCAB,
                                         dtype=jnp.int32)
    seqs_lexicon_bmes_ids = jax.random.randint(k5, (B, L, LEX_W), 0, N_BMES,
                                               dtype=jnp.int32)
    # at least one valid lexicon entry per token (matches tokenize() guarantee)
    rest_mask = jax.random.bernoulli(k6, 0.6, (B, L, LEX_W - 1)).astype(jnp.int32)
    att_lexicon_mask = jnp.concatenate(
        [jnp.ones((B, L, 1), jnp.int32), rest_mask], axis=-1)
    att_unigram_mask = jnp.ones((B, L), jnp.int32)   # full-length sequences

    out = forward(params, seqs_unigram_ids, seqs_lexicon_embed, seqs_pinyin_ids,
                  seqs_lexicon_bmes_ids, seqs_bigram_embed, att_lexicon_mask,
                  att_unigram_mask)
    out = jax.block_until_ready(out)

    assert out.shape == (B, L, HIDDEN_OUT), out.shape
    assert bool(jnp.all(jnp.isfinite(out)))

    ref = reference_forward(raw, seqs_unigram_ids, seqs_lexicon_embed,
                            seqs_pinyin_ids, seqs_lexicon_bmes_ids,
                            seqs_bigram_embed, att_lexicon_mask)
    assert bool(jnp.allclose(out, ref, atol=1e-2, rtol=1e-2)), \
        float(jnp.max(jnp.abs(out - ref)))

    print("KERNEL_OK")
</pallas_src>

<mosaic_0001>
module attributes {stable_mosaic.version = 11 : i64} {
  func.func @fused_encoder_kernel(%arg0: memref<2x8x32xf32, #tpu.memory_space<vmem>>, %arg1: memref<64x64xf32, #tpu.memory_space<vmem>>, %arg2: memref<16x4xf32, #tpu.memory_space<vmem>>, %arg3: memref<32x256xf32, #tpu.memory_space<vmem>>, %arg4: memref<32x256xf32, #tpu.memory_space<vmem>>, %arg5: memref<1x256xf32, #tpu.memory_space<vmem>>, %arg6: memref<64x32xf32, #tpu.memory_space<vmem>>, %arg7: memref<1x32xf32, #tpu.memory_space<vmem>>, %arg8: memref<16x68xf32, #tpu.memory_space<vmem>>) attributes {dimension_semantics = [], scalar_prefetch = 0 : i64, scratch_operands = 0 : i64, tpu.core_type = #tpu.core_type<tc>} {
    %c0 = arith.constant 0 : index
    %c0_0 = arith.constant 0 : index
    %c0_1 = arith.constant 0 : index
    %0 = vector.load %arg0[%c0, %c0_0, %c0_1] : memref<2x8x32xf32, #tpu.memory_space<vmem>>, vector<2x8x32xf32>
    %c0_2 = arith.constant 0 : index
    %c0_3 = arith.constant 0 : index
    %1 = vector.load %arg3[%c0_2, %c0_3] : memref<32x256xf32, #tpu.memory_space<vmem>>, vector<32x256xf32>
    %c0_4 = arith.constant 0 : index
    %c0_5 = arith.constant 0 : index
    %2 = vector.load %arg4[%c0_4, %c0_5] : memref<32x256xf32, #tpu.memory_space<vmem>>, vector<32x256xf32>
    %c0_6 = arith.constant 0 : index
    %c0_7 = arith.constant 0 : index
    %3 = vector.load %arg5[%c0_6, %c0_7] : memref<1x256xf32, #tpu.memory_space<vmem>>, vector<1x256xf32>
    %4 = tpu.iota {dimensions = array<i32: 0>} : vector<4x128xi32>
    %c2_i32 = arith.constant 2 : i32
    %5 = vector.broadcast %c2_i32 : i32 to vector<4x128xi32>
    %6 = arith.cmpi slt, %4, %5 : vector<4x128xi32>
    %cst = arith.constant 0.000000e+00 : f32
    %7 = vector.broadcast %cst : f32 to vector<4x32xf32>
    %cst_8 = arith.constant 0.000000e+00 : f32
    %8 = vector.broadcast %cst_8 : f32 to vector<4x32xf32>
    %9 = vector.extract_strided_slice %0 {offsets = [0, 0, 0], sizes = [2, 1, 32], strides = [1, 1, 1]} : vector<2x8x32xf32> to vector<2x1x32xf32>
    %10 = vector.shape_cast %9 : vector<2x1x32xf32> to vector<2x32xf32>
    %11 = vector.extract_strided_slice %0 {offsets = [0, 7, 0], sizes = [2, 1, 32], strides = [1, 1, 1]} : vector<2x8x32xf32> to vector<2x1x32xf32>
    %12 = vector.shape_cast %11 : vector<2x1x32xf32> to vector<2x32xf32>
    %13 = tpu.concatenate %10, %12 in 0 : vector<2x32xf32>, vector<2x32xf32> -> vector<4x32xf32>
    %cst_9 = arith.constant dense<0.000000e+00> : vector<4x256xf32>
    %14 = tpu.matmul %13, %1, %cst_9 {dimension_numbers = #tpu.dot_dimension_numbers<[1], [0], [0], [1], [0, 0, 1, 1], [], []>} : vector<4x32xf32>, vector<32x256xf32>, vector<4x256xf32> -> vector<4x256xf32>
    %cst_10 = arith.constant dense<0.000000e+00> : vector<4x256xf32>
    %15 = tpu.matmul %7, %2, %cst_10 {dimension_numbers = #tpu.dot_dimension_numbers<[1], [0], [0], [1], [0, 0, 1, 1], [], []>} : vector<4x32xf32>, vector<32x256xf32>, vector<4x256xf32> -> vector<4x256xf32>
    %16 = arith.addf %14, %15 : vector<4x256xf32>
    %17 = vector.broadcast %3 : vector<1x256xf32> to vector<4x256xf32>
    %18 = arith.addf %16, %17 : vector<4x256xf32>
    %19 = vector.extract_strided_slice %18 {offsets = [0, 0], sizes = [4, 128], strides = [1, 1]} : vector<4x256xf32> to vector<4x128xf32>
    %20 = vector.extract_strided_slice %18 {offsets = [0, 128], sizes = [4, 128], strides = [1, 1]} : vector<4x256xf32> to vector<4x128xf32>
    %21 = arith.select %6, %19, %20 : vector<4x128xi1>, vector<4x128xf32>
    %22 = vector.extract_strided_slice %21 {offsets = [0, 0], sizes = [4, 32], strides = [1, 1]} : vector<4x128xf32> to vector<4x32xf32>
    %23 = arith.negf %22 : vector<4x32xf32>
    %24 = math.exp %23 : vector<4x32xf32>
    %cst_11 = arith.constant 1.000000e+00 : f32
    %25 = vector.broadcast %cst_11 : f32 to vector<4x32xf32>
    %26 = arith.addf %25, %24 : vector<4x32xf32>
    %27 = arith.divf %25, %26 : vector<4x32xf32>
    %28 = vector.extract_strided_slice %21 {offsets = [0, 32], sizes = [4, 32], strides = [1, 1]} : vector<4x128xf32> to vector<4x32xf32>
    %29 = arith.negf %28 : vector<4x32xf32>
    %30 = math.exp %29 : vector<4x32xf32>
    %cst_12 = arith.constant 1.000000e+00 : f32
    %31 = vector.broadcast %cst_12 : f32 to vector<4x32xf32>
    %32 = arith.addf %31, %30 : vector<4x32xf32>
    %33 = arith.divf %31, %32 : vector<4x32xf32>
    %34 = vector.extract_strided_slice %21 {offsets = [0, 64], sizes = [4, 32], strides = [1, 1]} : vector<4x128xf32> to vector<4x32xf32>
    %35 = math.tanh %34 : vector<4x32xf32>
    %36 = vector.extract_strided_slice %21 {offsets = [0, 96], sizes = [4, 32], strides = [1, 1]} : vector<4x128xf32> to vector<4x32xf32>
    %37 = arith.negf %36 : vector<4x32xf32>
    %38 = math.exp %37 : vector<4x32xf32>
    %cst_13 = arith.constant 1.000000e+00 : f32
    %39 = vector.broadcast %cst_13 : f32 to vector<4x32xf32>
    %40 = arith.addf %39, %38 : vector<4x32xf32>
    %41 = arith.divf %39, %40 : vector<4x32xf32>
    %42 = arith.mulf %33, %8 : vector<4x32xf32>
    %43 = arith.mulf %27, %35 : vector<4x32xf32>
    %44 = arith.addf %42, %43 : vector<4x32xf32>
    %45 = math.tanh %44 : vector<4x32xf32>
    %46 = arith.mulf %41, %45 : vector<4x32xf32>
    %47 = vector.extract_strided_slice %0 {offsets = [0, 1, 0], sizes = [2, 1, 32], strides = [1, 1, 1]} : vector<2x8x32xf32> to vector<2x1x32xf32>
    %48 = vector.shape_cast %47 : vector<2x1x32xf32> to vector<2x32xf32>
    %49 = vector.extract_strided_slice %0 {offsets = [0, 6, 0], sizes = [2, 1, 32], strides = [1, 1, 1]} : vector<2x8x32xf32> to vector<2x1x32xf32>
    %50 = vector.shape_cast %49 : vector<2x1x32xf32> to vector<2x32xf32>
    %51 = tpu.concatenate %48, %50 in 0 : vector<2x32xf32>, vector<2x32xf32> -> vector<4x32xf32>
    %cst_14 = arith.constant dense<0.000000e+00> : vector<4x256xf32>
    %52 = tpu.matmul %51, %1, %cst_14 {dimension_numbers = #tpu.dot_dimension_numbers<[1], [0], [0], [1], [0, 0, 1, 1], [], []>} : vector<4x32xf32>, vector<32x256xf32>, vector<4x256xf32> -> vector<4x256xf32>
    %cst_15 = arith.constant dense<0.000000e+00> : vector<4x256xf32>
    %53 = tpu.matmul %46, %2, %cst_15 {dimension_numbers = #tpu.dot_dimension_numbers<[1], [0], [0], [1], [0, 0, 1, 1], [], []>} : vector<4x32xf32>, vector<32x256xf32>, vector<4x256xf32> -> vector<4x256xf32>
    %54 = arith.addf %52, %53 : vector<4x256xf32>
    %55 = vector.broadcast %3 : vector<1x256xf32> to vector<4x256xf32>
    %56 = arith.addf %54, %55 : vector<4x256xf32>
    %57 = vector.extract_strided_slice %56 {offsets = [0, 0], sizes = [4, 128], strides = [1, 1]} : vector<4x256xf32> to vector<4x128xf32>
    %58 = vector.extract_strided_slice %56 {offsets = [0, 128], sizes = [4, 128], strides = [1, 1]} : vector<4x256xf32> to vector<4x128xf32>
    %59 = arith.select %6, %57, %58 : vector<4x128xi1>, vector<4x128xf32>
    %60 = vector.extract_strided_slice %59 {offsets = [0, 0], sizes = [4, 32], strides = [1, 1]} : vector<4x128xf32> to vector<4x32xf32>
    %61 = arith.negf %60 : vector<4x32xf32>
    %62 = math.exp %61 : vector<4x32xf32>
    %cst_16 = arith.constant 1.000000e+00 : f32
    %63 = vector.broadcast %cst_16 : f32 to vector<4x32xf32>
    %64 = arith.addf %63, %62 : vector<4x32xf32>
    %65 = arith.divf %63, %64 : vector<4x32xf32>
    %66 = vector.extract_strided_slice %59 {offsets = [0, 32], sizes = [4, 32], strides = [1, 1]} : vector<4x128xf32> to vector<4x32xf32>
    %67 = arith.negf %66 : vector<4x32xf32>
    %68 = math.exp %67 : vector<4x32xf32>
    %cst_17 = arith.constant 1.000000e+00 : f32
    %69 = vector.broadcast %cst_17 : f32 to vector<4x32xf32>
    %70 = arith.addf %69, %68 : vector<4x32xf32>
    %71 = arith.divf %69, %70 : vector<4x32xf32>
    %72 = vector.extract_strided_slice %59 {offsets = [0, 64], sizes = [4, 32], strides = [1, 1]} : vector<4x128xf32> to vector<4x32xf32>
    %73 = math.tanh %72 : vector<4x32xf32>
    %74 = vector.extract_strided_slice %59 {offsets = [0, 96], sizes = [4, 32], strides = [1, 1]} : vector<4x128xf32> to vector<4x32xf32>
    %75 = arith.negf %74 : vector<4x32xf32>
    %76 = math.exp %75 : vector<4x32xf32>
    %cst_18 = arith.constant 1.000000e+00 : f32
    %77 = vector.broadcast %cst_18 : f32 to vector<4x32xf32>
    %78 = arith.addf %77, %76 : vector<4x32xf32>
    %79 = arith.divf %77, %78 : vector<4x32xf32>
    %80 = arith.mulf %71, %44 : vector<4x32xf32>
    %81 = arith.mulf %65, %73 : vector<4x32xf32>
    %82 = arith.addf %80, %81 : vector<4x32xf32>
    %83 = math.tanh %82 : vector<4x32xf32>
    %84 = arith.mulf %79, %83 : vector<4x32xf32>
    %85 = vector.extract_strided_slice %0 {offsets = [0, 2, 0], sizes = [2, 1, 32], strides = [1, 1, 1]} : vector<2x8x32xf32> to vector<2x1x32xf32>
    %86 = vector.shape_cast %85 : vector<2x1x32xf32> to vector<2x32xf32>
    %87 = vector.extract_strided_slice %0 {offsets = [0, 5, 0], sizes = [2, 1, 32], strides = [1, 1, 1]} : vector<2x8x32xf32> to vector<2x1x32xf32>
    %88 = vector.shape_cast %87 : vector<2x1x32xf32> to vector<2x32xf32>
    %89 = tpu.concatenate %86, %88 in 0 : vector<2x32xf32>, vector<2x32xf32> -> vector<4x32xf32>
    %cst_19 = arith.constant dense<0.000000e+00> : vector<4x256xf32>
    %90 = tpu.matmul %89, %1, %cst_19 {dimension_numbers = #tpu.dot_dimension_numbers<[1], [0], [0], [1], [0, 0, 1, 1], [], []>} : vector<4x32xf32>, vector<32x256xf32>, vector<4x256xf32> -> vector<4x256xf32>
    %cst_20 = arith.constant dense<0.000000e+00> : vector<4x256xf32>
    %91 = tpu.matmul %84, %2, %cst_20 {dimension_numbers = #tpu.dot_dimension_numbers<[1], [0], [0], [1], [0, 0, 1, 1], [], []>} : vector<4x32xf32>, vector<32x256xf32>, vector<4x256xf32> -> vector<4x256xf32>
    %92 = arith.addf %90, %91 : vector<4x256xf32>
    %93 = vector.broadcast %3 : vector<1x256xf32> to vector<4x256xf32>
    %94 = arith.addf %92, %93 : vector<4x256xf32>
    %95 = vector.extract_strided_slice %94 {offsets = [0, 0], sizes = [4, 128], strides = [1, 1]} : vector<4x256xf32> to vector<4x128xf32>
    %96 = vector.extract_strided_slice %94 {offsets = [0, 128], sizes = [4, 128], strides = [1, 1]} : vector<4x256xf32> to vector<4x128xf32>
    %97 = arith.select %6, %95, %96 : vector<4x128xi1>, vector<4x128xf32>
    %98 = vector.extract_strided_slice %97 {offsets = [0, 0], sizes = [4, 32], strides = [1, 1]} : vector<4x128xf32> to vector<4x32xf32>
    %99 = arith.negf %98 : vector<4x32xf32>
    %100 = math.exp %99 : vector<4x32xf32>
    %cst_21 = arith.constant 1.000000e+00 : f32
    %101 = vector.broadcast %cst_21 : f32 to vector<4x32xf32>
    %102 = arith.addf %101, %100 : vector<4x32xf32>
    %103 = arith.divf %101, %102 : vector<4x32xf32>
    %104 = vector.extract_strided_slice %97 {offsets = [0, 32], sizes = [4, 32], strides = [1, 1]} : vector<4x128xf32> to vector<4x32xf32>
    %105 = arith.negf %104 : vector<4x32xf32>
    %106 = math.exp %105 : vector<4x32xf32>
    %cst_22 = arith.constant 1.000000e+00 : f32
    %107 = vector.broadcast %cst_22 : f32 to vector<4x32xf32>
    %108 = arith.addf %107, %106 : vector<4x32xf32>
    %109 = arith.divf %107, %108 : vector<4x32xf32>
    %110 = vector.extract_strided_slice %97 {offsets = [0, 64], sizes = [4, 32], strides = [1, 1]} : vector<4x128xf32> to vector<4x32xf32>
    %111 = math.tanh %110 : vector<4x32xf32>
    %112 = vector.extract_strided_slice %97 {offsets = [0, 96], sizes = [4, 32], strides = [1, 1]} : vector<4x128xf32> to vector<4x32xf32>
    %113 = arith.negf %112 : vector<4x32xf32>
    %114 = math.exp %113 : vector<4x32xf32>
    %cst_23 = arith.constant 1.000000e+00 : f32
    %115 = vector.broadcast %cst_23 : f32 to vector<4x32xf32>
    %116 = arith.addf %115, %114 : vector<4x32xf32>
    %117 = arith.divf %115, %116 : vector<4x32xf32>
    %118 = arith.mulf %109, %82 : vector<4x32xf32>
    %119 = arith.mulf %103, %111 : vector<4x32xf32>
    %120 = arith.addf %118, %119 : vector<4x32xf32>
    %121 = math.tanh %120 : vector<4x32xf32>
    %122 = arith.mulf %117, %121 : vector<4x32xf32>
    %123 = vector.extract_strided_slice %0 {offsets = [0, 3, 0], sizes = [2, 1, 32], strides = [1, 1, 1]} : vector<2x8x32xf32> to vector<2x1x32xf32>
    %124 = vector.shape_cast %123 : vector<2x1x32xf32> to vector<2x32xf32>
    %125 = vector.extract_strided_slice %0 {offsets = [0, 4, 0], sizes = [2, 1, 32], strides = [1, 1, 1]} : vector<2x8x32xf32> to vector<2x1x32xf32>
    %126 = vector.shape_cast %125 : vector<2x1x32xf32> to vector<2x32xf32>
    %127 = tpu.concatenate %124, %126 in 0 : vector<2x32xf32>, vector<2x32xf32> -> vector<4x32xf32>
    %cst_24 = arith.constant dense<0.000000e+00> : vector<4x256xf32>
    %128 = tpu.matmul %127, %1, %cst_24 {dimension_numbers = #tpu.dot_dimension_numbers<[1], [0], [0], [1], [0, 0, 1, 1], [], []>} : vector<4x32xf32>, vector<32x256xf32>, vector<4x256xf32> -> vector<4x256xf32>
    %cst_25 = arith.constant dense<0.000000e+00> : vector<4x256xf32>
    %129 = tpu.matmul %122, %2, %cst_25 {dimension_numbers = #tpu.dot_dimension_numbers<[1], [0], [0], [1], [0, 0, 1, 1], [], []>} : vector<4x32xf32>, vector<32x256xf32>, vector<4x256xf32> -> vector<4x256xf32>
    %130 = arith.addf %128, %129 : vector<4x256xf32>
    %131 = vector.broadcast %3 : vector<1x256xf32> to vector<4x256xf32>
    %132 = arith.addf %130, %131 : vector<4x256xf32>
    %133 = vector.extract_strided_slice %132 {offsets = [0, 0], sizes = [4, 128], strides = [1, 1]} : vector<4x256xf32> to vector<4x128xf32>
    %134 = vector.extract_strided_slice %132 {offsets = [0, 128], sizes = [4, 128], strides = [1, 1]} : vector<4x256xf32> to vector<4x128xf32>
    %135 = arith.select %6, %133, %134 : vector<4x128xi1>, vector<4x128xf32>
    %136 = vector.extract_strided_slice %135 {offsets = [0, 0], sizes = [4, 32], strides = [1, 1]} : vector<4x128xf32> to vector<4x32xf32>
    %137 = arith.negf %136 : vector<4x32xf32>
    %138 = math.exp %137 : vector<4x32xf32>
    %cst_26 = arith.constant 1.000000e+00 : f32
    %139 = vector.broadcast %cst_26 : f32 to vector<4x32xf32>
    %140 = arith.addf %139, %138 : vector<4x32xf32>
    %141 = arith.divf %139, %140 : vector<4x32xf32>
    %142 = vector.extract_strided_slice %135 {offsets = [0, 32], sizes = [4, 32], strides = [1, 1]} : vector<4x128xf32> to vector<4x32xf32>
    %143 = arith.negf %142 : vector<4x32xf32>
    %144 = math.exp %143 : vector<4x32xf32>
    %cst_27 = arith.constant 1.000000e+00 : f32
    %145 = vector.broadcast %cst_27 : f32 to vector<4x32xf32>
    %146 = arith.addf %145, %144 : vector<4x32xf32>
    %147 = arith.divf %145, %146 : vector<4x32xf32>
    %148 = vector.extract_strided_slice %135 {offsets = [0, 64], sizes = [4, 32], strides = [1, 1]} : vector<4x128xf32> to vector<4x32xf32>
    %149 = math.tanh %148 : vector<4x32xf32>
    %150 = vector.extract_strided_slice %135 {offsets = [0, 96], sizes = [4, 32], strides = [1, 1]} : vector<4x128xf32> to vector<4x32xf32>
    %151 = arith.negf %150 : vector<4x32xf32>
    %152 = math.exp %151 : vector<4x32xf32>
    %cst_28 = arith.constant 1.000000e+00 : f32
    %153 = vector.broadcast %cst_28 : f32 to vector<4x32xf32>
    %154 = arith.addf %153, %152 : vector<4x32xf32>
    %155 = arith.divf %153, %154 : vector<4x32xf32>
    %156 = arith.mulf %147, %120 : vector<4x32xf32>
    %157 = arith.mulf %141, %149 : vector<4x32xf32>
    %158 = arith.addf %156, %157 : vector<4x32xf32>
    %159 = math.tanh %158 : vector<4x32xf32>
    %160 = arith.mulf %155, %159 : vector<4x32xf32>
    %161 = vector.extract_strided_slice %0 {offsets = [0, 4, 0], sizes = [2, 1, 32], strides = [1, 1, 1]} : vector<2x8x32xf32> to vector<2x1x32xf32>
    %162 = vector.shape_cast %161 : vector<2x1x32xf32> to vector<2x32xf32>
    %163 = vector.extract_strided_slice %0 {offsets = [0, 3, 0], sizes = [2, 1, 32], strides = [1, 1, 1]} : vector<2x8x32xf32> to vector<2x1x32xf32>
    %164 = vector.shape_cast %163 : vector<2x1x32xf32> to vector<2x32xf32>
    %165 = tpu.concatenate %162, %164 in 0 : vector<2x32xf32>, vector<2x32xf32> -> vector<4x32xf32>
    %cst_29 = arith.constant dense<0.000000e+00> : vector<4x256xf32>
    %166 = tpu.matmul %165, %1, %cst_29 {dimension_numbers = #tpu.dot_dimension_numbers<[1], [0], [0], [1], [0, 0, 1, 1], [], []>} : vector<4x32xf32>, vector<32x256xf32>, vector<4x256xf32> -> vector<4x256xf32>
    %cst_30 = arith.constant dense<0.000000e+00> : vector<4x256xf32>
    %167 = tpu.matmul %160, %2, %cst_30 {dimension_numbers = #tpu.dot_dimension_numbers<[1], [0], [0], [1], [0, 0, 1, 1], [], []>} : vector<4x32xf32>, vector<32x256xf32>, vector<4x256xf32> -> vector<4x256xf32>
    %168 = arith.addf %166, %167 : vector<4x256xf32>
    %169 = vector.broadcast %3 : vector<1x256xf32> to vector<4x256xf32>
    %170 = arith.addf %168, %169 : vector<4x256xf32>
    %171 = vector.extract_strided_slice %170 {offsets = [0, 0], sizes = [4, 128], strides = [1, 1]} : vector<4x256xf32> to vector<4x128xf32>
    %172 = vector.extract_strided_slice %170 {offsets = [0, 128], sizes = [4, 128], strides = [1, 1]} : vector<4x256xf32> to vector<4x128xf32>
    %173 = arith.select %6, %171, %172 : vector<4x128xi1>, vector<4x128xf32>
    %174 = vector.extract_strided_slice %173 {offsets = [0, 0], sizes = [4, 32], strides = [1, 1]} : vector<4x128xf32> to vector<4x32xf32>
    %175 = arith.negf %174 : vector<4x32xf32>
    %176 = math.exp %175 : vector<4x32xf32>
    %cst_31 = arith.constant 1.000000e+00 : f32
    %177 = vector.broadcast %cst_31 : f32 to vector<4x32xf32>
    %178 = arith.addf %177, %176 : vector<4x32xf32>
    %179 = arith.divf %177, %178 : vector<4x32xf32>
    %180 = vector.extract_strided_slice %173 {offsets = [0, 32], sizes = [4, 32], strides = [1, 1]} : vector<4x128xf32> to vector<4x32xf32>
    %181 = arith.negf %180 : vector<4x32xf32>
    %182 = math.exp %181 : vector<4x32xf32>
    %cst_32 = arith.constant 1.000000e+00 : f32
    %183 = vector.broadcast %cst_32 : f32 to vector<4x32xf32>
    %184 = arith.addf %183, %182 : vector<4x32xf32>
    %185 = arith.divf %183, %184 : vector<4x32xf32>
    %186 = vector.extract_strided_slice %173 {offsets = [0, 64], sizes = [4, 32], strides = [1, 1]} : vector<4x128xf32> to vector<4x32xf32>
    %187 = math.tanh %186 : vector<4x32xf32>
    %188 = vector.extract_strided_slice %173 {offsets = [0, 96], sizes = [4, 32], strides = [1, 1]} : vector<4x128xf32> to vector<4x32xf32>
    %189 = arith.negf %188 : vector<4x32xf32>
    %190 = math.exp %189 : vector<4x32xf32>
    %cst_33 = arith.constant 1.000000e+00 : f32
    %191 = vector.broadcast %cst_33 : f32 to vector<4x32xf32>
    %192 = arith.addf %191, %190 : vector<4x32xf32>
    %193 = arith.divf %191, %192 : vector<4x32xf32>
    %194 = arith.mulf %185, %158 : vector<4x32xf32>
    %195 = arith.mulf %179, %187 : vector<4x32xf32>
    %196 = arith.addf %194, %195 : vector<4x32xf32>
    %197 = math.tanh %196 : vector<4x32xf32>
    %198 = arith.mulf %193, %197 : vector<4x32xf32>
    %199 = vector.extract_strided_slice %0 {offsets = [0, 5, 0], sizes = [2, 1, 32], strides = [1, 1, 1]} : vector<2x8x32xf32> to vector<2x1x32xf32>
    %200 = vector.shape_cast %199 : vector<2x1x32xf32> to vector<2x32xf32>
    %201 = vector.extract_strided_slice %0 {offsets = [0, 2, 0], sizes = [2, 1, 32], strides = [1, 1, 1]} : vector<2x8x32xf32> to vector<2x1x32xf32>
    %202 = vector.shape_cast %201 : vector<2x1x32xf32> to vector<2x32xf32>
    %203 = tpu.concatenate %200, %202 in 0 : vector<2x32xf32>, vector<2x32xf32> -> vector<4x32xf32>
    %cst_34 = arith.constant dense<0.000000e+00> : vector<4x256xf32>
    %204 = tpu.matmul %203, %1, %cst_34 {dimension_numbers = #tpu.dot_dimension_numbers<[1], [0], [0], [1], [0, 0, 1, 1], [], []>} : vector<4x32xf32>, vector<32x256xf32>, vector<4x256xf32> -> vector<4x256xf32>
    %cst_35 = arith.constant dense<0.000000e+00> : vector<4x256xf32>
    %205 = tpu.matmul %198, %2, %cst_35 {dimension_numbers = #tpu.dot_dimension_numbers<[1], [0], [0], [1], [0, 0, 1, 1], [], []>} : vector<4x32xf32>, vector<32x256xf32>, vector<4x256xf32> -> vector<4x256xf32>
    %206 = arith.addf %204, %205 : vector<4x256xf32>
    %207 = vector.broadcast %3 : vector<1x256xf32> to vector<4x256xf32>
    %208 = arith.addf %206, %207 : vector<4x256xf32>
    %209 = vector.extract_strided_slice %208 {offsets = [0, 0], sizes = [4, 128], strides = [1, 1]} : vector<4x256xf32> to vector<4x128xf32>
    %210 = vector.extract_strided_slice %208 {offsets = [0, 128], sizes = [4, 128], strides = [1, 1]} : vector<4x256xf32> to vector<4x128xf32>
    %211 = arith.select %6, %209, %210 : vector<4x128xi1>, vector<4x128xf32>
    %212 = vector.extract_strided_slice %211 {offsets = [0, 0], sizes = [4, 32], strides = [1, 1]} : vector<4x128xf32> to vector<4x32xf32>
    %213 = arith.negf %212 : vector<4x32xf32>
    %214 = math.exp %213 : vector<4x32xf32>
    %cst_36 = arith.constant 1.000000e+00 : f32
    %215 = vector.broadcast %cst_36 : f32 to vector<4x32xf32>
    %216 = arith.addf %215, %214 : vector<4x32xf32>
    %217 = arith.divf %215, %216 : vector<4x32xf32>
    %218 = vector.extract_strided_slice %211 {offsets = [0, 32], sizes = [4, 32], strides = [1, 1]} : vector<4x128xf32> to vector<4x32xf32>
    %219 = arith.negf %218 : vector<4x32xf32>
    %220 = math.exp %219 : vector<4x32xf32>
    %cst_37 = arith.constant 1.000000e+00 : f32
    %221 = vector.broadcast %cst_37 : f32 to vector<4x32xf32>
    %222 = arith.addf %221, %220 : vector<4x32xf32>
    %223 = arith.divf %221, %222 : vector<4x32xf32>
    %224 = vector.extract_strided_slice %211 {offsets = [0, 64], sizes = [4, 32], strides = [1, 1]} : vector<4x128xf32> to vector<4x32xf32>
    %225 = math.tanh %224 : vector<4x32xf32>
    %226 = vector.extract_strided_slice %211 {offsets = [0, 96], sizes = [4, 32], strides = [1, 1]} : vector<4x128xf32> to vector<4x32xf32>
    %227 = arith.negf %226 : vector<4x32xf32>
    %228 = math.exp %227 : vector<4x32xf32>
    %cst_38 = arith.constant 1.000000e+00 : f32
    %229 = vector.broadcast %cst_38 : f32 to vector<4x32xf32>
    %230 = arith.addf %229, %228 : vector<4x32xf32>
    %231 = arith.divf %229, %230 : vector<4x32xf32>
    %232 = arith.mulf %223, %196 : vector<4x32xf32>
    %233 = arith.mulf %217, %225 : vector<4x32xf32>
    %234 = arith.addf %232, %233 : vector<4x32xf32>
    %235 = math.tanh %234 : vector<4x32xf32>
    %236 = arith.mulf %231, %235 : vector<4x32xf32>
    %237 = vector.extract_strided_slice %0 {offsets = [0, 6, 0], sizes = [2, 1, 32], strides = [1, 1, 1]} : vector<2x8x32xf32> to vector<2x1x32xf32>
    %238 = vector.shape_cast %237 : vector<2x1x32xf32> to vector<2x32xf32>
    %239 = vector.extract_strided_slice %0 {offsets = [0, 1, 0], sizes = [2, 1, 32], strides = [1, 1, 1]} : vector<2x8x32xf32> to vector<2x1x32xf32>
    %240 = vector.shape_cast %239 : vector<2x1x32xf32> to vector<2x32xf32>
    %241 = tpu.concatenate %238, %240 in 0 : vector<2x32xf32>, vector<2x32xf32> -> vector<4x32xf32>
    %cst_39 = arith.constant dense<0.000000e+00> : vector<4x256xf32>
    %242 = tpu.matmul %241, %1, %cst_39 {dimension_numbers = #tpu.dot_dimension_numbers<[1], [0], [0], [1], [0, 0, 1, 1], [], []>} : vector<4x32xf32>, vector<32x256xf32>, vector<4x256xf32> -> vector<4x256xf32>
    %cst_40 = arith.constant dense<0.000000e+00> : vector<4x256xf32>
    %243 = tpu.matmul %236, %2, %cst_40 {dimension_numbers = #tpu.dot_dimension_numbers<[1], [0], [0], [1], [0, 0, 1, 1], [], []>} : vector<4x32xf32>, vector<32x256xf32>, vector<4x256xf32> -> vector<4x256xf32>
    %244 = arith.addf %242, %243 : vector<4x256xf32>
    %245 = vector.broadcast %3 : vector<1x256xf32> to vector<4x256xf32>
    %246 = arith.addf %244, %245 : vector<4x256xf32>
    %247 = vector.extract_strided_slice %246 {offsets = [0, 0], sizes = [4, 128], strides = [1, 1]} : vector<4x256xf32> to vector<4x128xf32>
    %248 = vector.extract_strided_slice %246 {offsets = [0, 128], sizes = [4, 128], strides = [1, 1]} : vector<4x256xf32> to vector<4x128xf32>
    %249 = arith.select %6, %247, %248 : vector<4x128xi1>, vector<4x128xf32>
    %250 = vector.extract_strided_slice %249 {offsets = [0, 0], sizes = [4, 32], strides = [1, 1]} : vector<4x128xf32> to vector<4x32xf32>
    %251 = arith.negf %250 : vector<4x32xf32>
    %252 = math.exp %251 : vector<4x32xf32>
    %cst_41 = arith.constant 1.000000e+00 : f32
    %253 = vector.broadcast %cst_41 : f32 to vector<4x32xf32>
    %254 = arith.addf %253, %252 : vector<4x32xf32>
    %255 = arith.divf %253, %254 : vector<4x32xf32>
    %256 = vector.extract_strided_slice %249 {offsets = [0, 32], sizes = [4, 32], strides = [1, 1]} : vector<4x128xf32> to vector<4x32xf32>
    %257 = arith.negf %256 : vector<4x32xf32>
    %258 = math.exp %257 : vector<4x32xf32>
    %cst_42 = arith.constant 1.000000e+00 : f32
    %259 = vector.broadcast %cst_42 : f32 to vector<4x32xf32>
    %260 = arith.addf %259, %258 : vector<4x32xf32>
    %261 = arith.divf %259, %260 : vector<4x32xf32>
    %262 = vector.extract_strided_slice %249 {offsets = [0, 64], sizes = [4, 32], strides = [1, 1]} : vector<4x128xf32> to vector<4x32xf32>
    %263 = math.tanh %262 : vector<4x32xf32>
    %264 = vector.extract_strided_slice %249 {offsets = [0, 96], sizes = [4, 32], strides = [1, 1]} : vector<4x128xf32> to vector<4x32xf32>
    %265 = arith.negf %264 : vector<4x32xf32>
    %266 = math.exp %265 : vector<4x32xf32>
    %cst_43 = arith.constant 1.000000e+00 : f32
    %267 = vector.broadcast %cst_43 : f32 to vector<4x32xf32>
    %268 = arith.addf %267, %266 : vector<4x32xf32>
    %269 = arith.divf %267, %268 : vector<4x32xf32>
    %270 = arith.mulf %261, %234 : vector<4x32xf32>
    %271 = arith.mulf %255, %263 : vector<4x32xf32>
    %272 = arith.addf %270, %271 : vector<4x32xf32>
    %273 = math.tanh %272 : vector<4x32xf32>
    %274 = arith.mulf %269, %273 : vector<4x32xf32>
    %275 = vector.extract_strided_slice %0 {offsets = [0, 7, 0], sizes = [2, 1, 32], strides = [1, 1, 1]} : vector<2x8x32xf32> to vector<2x1x32xf32>
    %276 = vector.shape_cast %275 : vector<2x1x32xf32> to vector<2x32xf32>
    %277 = vector.extract_strided_slice %0 {offsets = [0, 0, 0], sizes = [2, 1, 32], strides = [1, 1, 1]} : vector<2x8x32xf32> to vector<2x1x32xf32>
    %278 = vector.shape_cast %277 : vector<2x1x32xf32> to vector<2x32xf32>
    %279 = tpu.concatenate %276, %278 in 0 : vector<2x32xf32>, vector<2x32xf32> -> vector<4x32xf32>
    %cst_44 = arith.constant dense<0.000000e+00> : vector<4x256xf32>
    %280 = tpu.matmul %279, %1, %cst_44 {dimension_numbers = #tpu.dot_dimension_numbers<[1], [0], [0], [1], [0, 0, 1, 1], [], []>} : vector<4x32xf32>, vector<32x256xf32>, vector<4x256xf32> -> vector<4x256xf32>
    %cst_45 = arith.constant dense<0.000000e+00> : vector<4x256xf32>
    %281 = tpu.matmul %274, %2, %cst_45 {dimension_numbers = #tpu.dot_dimension_numbers<[1], [0], [0], [1], [0, 0, 1, 1], [], []>} : vector<4x32xf32>, vector<32x256xf32>, vector<4x256xf32> -> vector<4x256xf32>
    %282 = arith.addf %280, %281 : vector<4x256xf32>
    %283 = vector.broadcast %3 : vector<1x256xf32> to vector<4x256xf32>
    %284 = arith.addf %282, %283 : vector<4x256xf32>
    %285 = vector.extract_strided_slice %284 {offsets = [0, 0], sizes = [4, 128], strides = [1, 1]} : vector<4x256xf32> to vector<4x128xf32>
    %286 = vector.extract_strided_slice %284 {offsets = [0, 128], sizes = [4, 128], strides = [1, 1]} : vector<4x256xf32> to vector<4x128xf32>
    %287 = arith.select %6, %285, %286 : vector<4x128xi1>, vector<4x128xf32>
    %288 = vector.extract_strided_slice %287 {offsets = [0, 0], sizes = [4, 32], strides = [1, 1]} : vector<4x128xf32> to vector<4x32xf32>
    %289 = arith.negf %288 : vector<4x32xf32>
    %290 = math.exp %289 : vector<4x32xf32>
    %cst_46 = arith.constant 1.000000e+00 : f32
    %291 = vector.broadcast %cst_46 : f32 to vector<4x32xf32>
    %292 = arith.addf %291, %290 : vector<4x32xf32>
    %293 = arith.divf %291, %292 : vector<4x32xf32>
    %294 = vector.extract_strided_slice %287 {offsets = [0, 32], sizes = [4, 32], strides = [1, 1]} : vector<4x128xf32> to vector<4x32xf32>
    %295 = arith.negf %294 : vector<4x32xf32>
    %296 = math.exp %295 : vector<4x32xf32>
    %cst_47 = arith.constant 1.000000e+00 : f32
    %297 = vector.broadcast %cst_47 : f32 to vector<4x32xf32>
    %298 = arith.addf %297, %296 : vector<4x32xf32>
    %299 = arith.divf %297, %298 : vector<4x32xf32>
    %300 = vector.extract_strided_slice %287 {offsets = [0, 64], sizes = [4, 32], strides = [1, 1]} : vector<4x128xf32> to vector<4x32xf32>
    %301 = math.tanh %300 : vector<4x32xf32>
    %302 = vector.extract_strided_slice %287 {offsets = [0, 96], sizes = [4, 32], strides = [1, 1]} : vector<4x128xf32> to vector<4x32xf32>
    %303 = arith.negf %302 : vector<4x32xf32>
    %304 = math.exp %303 : vector<4x32xf32>
    %cst_48 = arith.constant 1.000000e+00 : f32
    %305 = vector.broadcast %cst_48 : f32 to vector<4x32xf32>
    %306 = arith.addf %305, %304 : vector<4x32xf32>
    %307 = arith.divf %305, %306 : vector<4x32xf32>
    %308 = arith.mulf %299, %272 : vector<4x32xf32>
    %309 = arith.mulf %293, %301 : vector<4x32xf32>
    %310 = arith.addf %308, %309 : vector<4x32xf32>
    %311 = math.tanh %310 : vector<4x32xf32>
    %312 = arith.mulf %307, %311 : vector<4x32xf32>
    %313 = vector.extract_strided_slice %46 {offsets = [0, 0], sizes = [1, 32], strides = [1, 1]} : vector<4x32xf32> to vector<1x32xf32>
    %314 = vector.extract_strided_slice %312 {offsets = [2, 0], sizes = [1, 32], strides = [1, 1]} : vector<4x32xf32> to vector<1x32xf32>
    %315 = arith.addf %313, %314 : vector<1x32xf32>
    %316 = vector.extract_strided_slice %84 {offsets = [0, 0], sizes = [1, 32], strides = [1, 1]} : vector<4x32xf32> to vector<1x32xf32>
    %317 = vector.extract_strided_slice %274 {offsets = [2, 0], sizes = [1, 32], strides = [1, 1]} : vector<4x32xf32> to vector<1x32xf32>
    %318 = arith.addf %316, %317 : vector<1x32xf32>
    %319 = vector.extract_strided_slice %122 {offsets = [0, 0], sizes = [1, 32], strides = [1, 1]} : vector<4x32xf32> to vector<1x32xf32>
    %320 = vector.extract_strided_slice %236 {offsets = [2, 0], sizes = [1, 32], strides = [1, 1]} : vector<4x32xf32> to vector<1x32xf32>
    %321 = arith.addf %319, %320 : vector<1x32xf32>
    %322 = vector.extract_strided_slice %160 {offsets = [0, 0], sizes = [1, 32], strides = [1, 1]} : vector<4x32xf32> to vector<1x32xf32>
    %323 = vector.extract_strided_slice %198 {offsets = [2, 0], sizes = [1, 32], strides = [1, 1]} : vector<4x32xf32> to vector<1x32xf32>
    %324 = arith.addf %322, %323 : vector<1x32xf32>
    %325 = vector.extract_strided_slice %198 {offsets = [0, 0], sizes = [1, 32], strides = [1, 1]} : vector<4x32xf32> to vector<1x32xf32>
    %326 = vector.extract_strided_slice %160 {offsets = [2, 0], sizes = [1, 32], strides = [1, 1]} : vector<4x32xf32> to vector<1x32xf32>
    %327 = arith.addf %325, %326 : vector<1x32xf32>
    %328 = vector.extract_strided_slice %236 {offsets = [0, 0], sizes = [1, 32], strides = [1, 1]} : vector<4x32xf32> to vector<1x32xf32>
    %329 = vector.extract_strided_slice %122 {offsets = [2, 0], sizes = [1, 32], strides = [1, 1]} : vector<4x32xf32> to vector<1x32xf32>
    %330 = arith.addf %328, %329 : vector<1x32xf32>
    %331 = vector.extract_strided_slice %274 {offsets = [0, 0], sizes = [1, 32], strides = [1, 1]} : vector<4x32xf32> to vector<1x32xf32>
    %332 = vector.extract_strided_slice %84 {offsets = [2, 0], sizes = [1, 32], strides = [1, 1]} : vector<4x32xf32> to vector<1x32xf32>
    %333 = arith.addf %331, %332 : vector<1x32xf32>
    %334 = vector.extract_strided_slice %312 {offsets = [0, 0], sizes = [1, 32], strides = [1, 1]} : vector<4x32xf32> to vector<1x32xf32>
    %335 = vector.extract_strided_slice %46 {offsets = [2, 0], sizes = [1, 32], strides = [1, 1]} : vector<4x32xf32> to vector<1x32xf32>
    %336 = arith.addf %334, %335 : vector<1x32xf32>
    %337 = vector.extract_strided_slice %46 {offsets = [1, 0], sizes = [1, 32], strides = [1, 1]} : vector<4x32xf32> to vector<1x32xf32>
    %338 = vector.extract_strided_slice %312 {offsets = [3, 0], sizes = [1, 32], strides = [1, 1]} : vector<4x32xf32> to vector<1x32xf32>
    %339 = arith.addf %337, %338 : vector<1x32xf32>
    %340 = vector.extract_strided_slice %84 {offsets = [1, 0], sizes = [1, 32], strides = [1, 1]} : vector<4x32xf32> to vector<1x32xf32>
    %341 = vector.extract_strided_slice %274 {offsets = [3, 0], sizes = [1, 32], strides = [1, 1]} : vector<4x32xf32> to vector<1x32xf32>
    %342 = arith.addf %340, %341 : vector<1x32xf32>
    %343 = vector.extract_strided_slice %122 {offsets = [1, 0], sizes = [1, 32], strides = [1, 1]} : vector<4x32xf32> to vector<1x32xf32>
    %344 = vector.extract_strided_slice %236 {offsets = [3, 0], sizes = [1, 32], strides = [1, 1]} : vector<4x32xf32> to vector<1x32xf32>
    %345 = arith.addf %343, %344 : vector<1x32xf32>
    %346 = vector.extract_strided_slice %160 {offsets = [1, 0], sizes = [1, 32], strides = [1, 1]} : vector<4x32xf32> to vector<1x32xf32>
    %347 = vector.extract_strided_slice %198 {offsets = [3, 0], sizes = [1, 32], strides = [1, 1]} : vector<4x32xf32> to vector<1x32xf32>
    %348 = arith.addf %346, %347 : vector<1x32xf32>
    %349 = vector.extract_strided_slice %198 {offsets = [1, 0], sizes = [1, 32], strides = [1, 1]} : vector<4x32xf32> to vector<1x32xf32>
    %350 = vector.extract_strided_slice %160 {offsets = [3, 0], sizes = [1, 32], strides = [1, 1]} : vector<4x32xf32> to vector<1x32xf32>
    %351 = arith.addf %349, %350 : vector<1x32xf32>
    %352 = vector.extract_strided_slice %236 {offsets = [1, 0], sizes = [1, 32], strides = [1, 1]} : vector<4x32xf32> to vector<1x32xf32>
    %353 = vector.extract_strided_slice %122 {offsets = [3, 0], sizes = [1, 32], strides = [1, 1]} : vector<4x32xf32> to vector<1x32xf32>
    %354 = arith.addf %352, %353 : vector<1x32xf32>
    %355 = vector.extract_strided_slice %274 {offsets = [1, 0], sizes = [1, 32], strides = [1, 1]} : vector<4x32xf32> to vector<1x32xf32>
    %356 = vector.extract_strided_slice %84 {offsets = [3, 0], sizes = [1, 32], strides = [1, 1]} : vector<4x32xf32> to vector<1x32xf32>
    %357 = arith.addf %355, %356 : vector<1x32xf32>
    %358 = vector.extract_strided_slice %312 {offsets = [1, 0], sizes = [1, 32], strides = [1, 1]} : vector<4x32xf32> to vector<1x32xf32>
    %359 = vector.extract_strided_slice %46 {offsets = [3, 0], sizes = [1, 32], strides = [1, 1]} : vector<4x32xf32> to vector<1x32xf32>
    %360 = arith.addf %358, %359 : vector<1x32xf32>
    %361 = tpu.concatenate %315, %318, %321, %324, %327, %330, %333, %336, %339, %342, %345, %348, %351, %354, %357, %360 in 0 : vector<1x32xf32>, vector<1x32xf32>, vector<1x32xf32>, vector<1x32xf32>, vector<1x32xf32>, vector<1x32xf32>, vector<1x32xf32>, vector<1x32xf32>, vector<1x32xf32>, vector<1x32xf32>, vector<1x32xf32>, vector<1x32xf32>, vector<1x32xf32>, vector<1x32xf32>, vector<1x32xf32>, vector<1x32xf32> -> vector<16x32xf32>
    %c0_49 = arith.constant 0 : index
    %c0_50 = arith.constant 0 : index
    %362 = vector.load %arg1[%c0_49, %c0_50] : memref<64x64xf32, #tpu.memory_space<vmem>>, vector<64x64xf32>
    %c0_51 = arith.constant 0 : index
    %c0_52 = arith.constant 0 : index
    %363 = vector.load %arg6[%c0_51, %c0_52] : memref<64x32xf32, #tpu.memory_space<vmem>>, vector<64x32xf32>
    %c0_53 = arith.constant 0 : index
    %c0_54 = arith.constant 0 : index
    %364 = vector.load %arg7[%c0_53, %c0_54] : memref<1x32xf32, #tpu.memory_space<vmem>>, vector<1x32xf32>
    %c0_55 = arith.constant 0 : index
    %c0_56 = arith.constant 0 : index
    %365 = vector.load %arg2[%c0_55, %c0_56] : memref<16x4xf32, #tpu.memory_space<vmem>>, vector<16x4xf32>
    %cst_57 = arith.constant dense<0.000000e+00> : vector<64x32xf32>
    %366 = tpu.matmul %362, %363, %cst_57 {dimension_numbers = #tpu.dot_dimension_numbers<[1], [0], [0], [1], [0, 0, 1, 1], [], []>} : vector<64x64xf32>, vector<64x32xf32>, vector<64x32xf32> -> vector<64x32xf32>
    %367 = vector.broadcast %364 : vector<1x32xf32> to vector<64x32xf32>
    %368 = arith.addf %366, %367 : vector<64x32xf32>
    %369 = vector.extract_strided_slice %368 {offsets = [0, 0], sizes = [16, 32], strides = [1, 1]} : vector<64x32xf32> to vector<16x32xf32>
    %370 = arith.mulf %369, %361 : vector<16x32xf32>
    %cst_58 = arith.constant dense<0.000000e+00> : vector<16xf32>
    %371 = vector.multi_reduction <add>, %370, %cst_58 [1] : vector<16x32xf32> to vector<16xf32>
    %372 = vector.shape_cast %371 : vector<16xf32> to vector<16x1xf32>
    %373 = vector.extract_strided_slice %365 {offsets = [0, 0], sizes = [16, 1], strides = [1, 1]} : vector<16x4xf32> to vector<16x1xf32>
    %cst_59 = arith.constant 0.000000e+00 : f32
    %374 = vector.broadcast %cst_59 : f32 to vector<16x1xf32>
    %375 = arith.cmpf ogt, %373, %374 : vector<16x1xf32>
    %cst_60 = arith.constant -1.000000e+09 : f32
    %376 = vector.broadcast %cst_60 : f32 to vector<16x1xf32>
    %377 = arith.select %375, %372, %376 : vector<16x1xi1>, vector<16x1xf32>
    %378 = vector.extract_strided_slice %368 {offsets = [16, 0], sizes = [16, 32], strides = [1, 1]} : vector<64x32xf32> to vector<16x32xf32>
    %379 = arith.mulf %378, %361 : vector<16x32xf32>
    %cst_61 = arith.constant dense<0.000000e+00> : vector<16xf32>
    %380 = vector.multi_reduction <add>, %379, %cst_61 [1] : vector<16x32xf32> to vector<16xf32>
    %381 = vector.shape_cast %380 : vector<16xf32> to vector<16x1xf32>
    %382 = vector.extract_strided_slice %365 {offsets = [0, 1], sizes = [16, 1], strides = [1, 1]} : vector<16x4xf32> to vector<16x1xf32>
    %cst_62 = arith.constant 0.000000e+00 : f32
    %383 = vector.broadcast %cst_62 : f32 to vector<16x1xf32>
    %384 = arith.cmpf ogt, %382, %383 : vector<16x1xf32>
    %cst_63 = arith.constant -1.000000e+09 : f32
    %385 = vector.broadcast %cst_63 : f32 to vector<16x1xf32>
    %386 = arith.select %384, %381, %385 : vector<16x1xi1>, vector<16x1xf32>
    %387 = vector.extract_strided_slice %368 {offsets = [32, 0], sizes = [16, 32], strides = [1, 1]} : vector<64x32xf32> to vector<16x32xf32>
    %388 = arith.mulf %387, %361 : vector<16x32xf32>
    %cst_64 = arith.constant dense<0.000000e+00> : vector<16xf32>
    %389 = vector.multi_reduction <add>, %388, %cst_64 [1] : vector<16x32xf32> to vector<16xf32>
    %390 = vector.shape_cast %389 : vector<16xf32> to vector<16x1xf32>
    %391 = vector.extract_strided_slice %365 {offsets = [0, 2], sizes = [16, 1], strides = [1, 1]} : vector<16x4xf32> to vector<16x1xf32>
    %cst_65 = arith.constant 0.000000e+00 : f32
    %392 = vector.broadcast %cst_65 : f32 to vector<16x1xf32>
    %393 = arith.cmpf ogt, %391, %392 : vector<16x1xf32>
    %cst_66 = arith.constant -1.000000e+09 : f32
    %394 = vector.broadcast %cst_66 : f32 to vector<16x1xf32>
    %395 = arith.select %393, %390, %394 : vector<16x1xi1>, vector<16x1xf32>
    %396 = vector.extract_strided_slice %368 {offsets = [48, 0], sizes = [16, 32], strides = [1, 1]} : vector<64x32xf32> to vector<16x32xf32>
    %397 = arith.mulf %396, %361 : vector<16x32xf32>
    %cst_67 = arith.constant dense<0.000000e+00> : vector<16xf32>
    %398 = vector.multi_reduction <add>, %397, %cst_67 [1] : vector<16x32xf32> to vector<16xf32>
    %399 = vector.shape_cast %398 : vector<16xf32> to vector<16x1xf32>
    %400 = vector.extract_strided_slice %365 {offsets = [0, 3], sizes = [16, 1], strides = [1, 1]} : vector<16x4xf32> to vector<16x1xf32>
    %cst_68 = arith.constant 0.000000e+00 : f32
    %401 = vector.broadcast %cst_68 : f32 to vector<16x1xf32>
    %402 = arith.cmpf ogt, %400, %401 : vector<16x1xf32>
    %cst_69 = arith.constant -1.000000e+09 : f32
    %403 = vector.broadcast %cst_69 : f32 to vector<16x1xf32>
    %404 = arith.select %402, %399, %403 : vector<16x1xi1>, vector<16x1xf32>
    %405 = arith.maximumf %377, %386 : vector<16x1xf32>
    %406 = arith.maximumf %405, %395 : vector<16x1xf32>
    %407 = arith.maximumf %406, %404 : vector<16x1xf32>
    %408 = arith.subf %377, %407 : vector<16x1xf32>
    %409 = math.exp %408 : vector<16x1xf32>
    %410 = arith.subf %386, %407 : vector<16x1xf32>
    %411 = math.exp %410 : vector<16x1xf32>
    %412 = arith.subf %395, %407 : vector<16x1xf32>
    %413 = math.exp %412 : vector<16x1xf32>
    %414 = arith.subf %404, %407 : vector<16x1xf32>
    %415 = math.exp %414 : vector<16x1xf32>
    %416 = arith.addf %409, %411 : vector<16x1xf32>
    %417 = arith.addf %416, %413 : vector<16x1xf32>
    %418 = arith.addf %417, %415 : vector<16x1xf32>
    %419 = tpu.reciprocal %418 {approx = true} : vector<16x1xf32> -> vector<16x1xf32>
    %cst_70 = arith.constant 0.000000e+00 : f32
    %420 = vector.broadcast %cst_70 : f32 to vector<16x64xf32>
    %421 = vector.extract_strided_slice %362 {offsets = [0, 0], sizes = [16, 64], strides = [1, 1]} : vector<64x64xf32> to vector<16x64xf32>
    %422 = arith.mulf %409, %419 : vector<16x1xf32>
    %423 = vector.broadcast %422 : vector<16x1xf32> to vector<16x64xf32>
    %424 = arith.mulf %423, %421 : vector<16x64xf32>
    %425 = arith.addf %420, %424 : vector<16x64xf32>
    %426 = vector.extract_strided_slice %362 {offsets = [16, 0], sizes = [16, 64], strides = [1, 1]} : vector<64x64xf32> to vector<16x64xf32>
    %427 = arith.mulf %411, %419 : vector<16x1xf32>
    %428 = vector.broadcast %427 : vector<16x1xf32> to vector<16x64xf32>
    %429 = arith.mulf %428, %426 : vector<16x64xf32>
    %430 = arith.addf %425, %429 : vector<16x64xf32>
    %431 = vector.extract_strided_slice %362 {offsets = [32, 0], sizes = [16, 64], strides = [1, 1]} : vector<64x64xf32> to vector<16x64xf32>
    %432 = arith.mulf %413, %419 : vector<16x1xf32>
    %433 = vector.broadcast %432 : vector<16x1xf32> to vector<16x64xf32>
    %434 = arith.mulf %433, %431 : vector<16x64xf32>
    %435 = arith.addf %430, %434 : vector<16x64xf32>
    %436 = vector.extract_strided_slice %362 {offsets = [48, 0], sizes = [16, 64], strides = [1, 1]} : vector<64x64xf32> to vector<16x64xf32>
    %437 = arith.mulf %415, %419 : vector<16x1xf32>
    %438 = vector.broadcast %437 : vector<16x1xf32> to vector<16x64xf32>
    %439 = arith.mulf %438, %436 : vector<16x64xf32>
    %440 = arith.addf %435, %439 : vector<16x64xf32>
    %c0_71 = arith.constant 0 : index
    %c0_72 = arith.constant 0 : index
    %441 = vector.load %arg8[%c0_71, %c0_72] : memref<16x68xf32, #tpu.memory_space<vmem>>, vector<16x32xf32>
    tpu.vector_store %arg8[%c0_71, %c0_72], %361 {strides = array<i32>} : memref<16x68xf32, #tpu.memory_space<vmem>>, vector<16x32xf32>,
    %442 = vector.extract_strided_slice %440 {offsets = [0, 0], sizes = [16, 36], strides = [1, 1]} : vector<16x64xf32> to vector<16x36xf32>
    %c0_73 = arith.constant 0 : index
    %c32 = arith.constant 32 : index
    %443 = vector.load %arg8[%c0_73, %c32] : memref<16x68xf32, #tpu.memory_space<vmem>>, vector<16x36xf32>
    tpu.vector_store %arg8[%c0_73, %c32], %442 {strides = array<i32>} : memref<16x68xf32, #tpu.memory_space<vmem>>, vector<16x36xf32>,
    return
  }
}

</mosaic_0001>

<llo_original>
// kernel: forward.1
$region0: #{forward.1}
  #allocation0 [shape = 'u32[]', space=smem, size = 0x4, offset = 0x4, fixed_abs, tag = 'smem constant byte address 0x4 - core index']
  #allocation1 [shape = 'u32[144,128]{1,0:T(1,128)}', space=vmem, size = 0x12000, scoped, tag = 'internal scratch']
  %s0 = inlined_call_operand.vmem [shape: f32[2,8,32], index: 0, kind: input, shape index: {}]
  %s1 = inlined_call_operand.vmem [shape: f32[64,64], index: 1, kind: input, shape index: {}]
  %s2 = inlined_call_operand.vmem [shape: f32[16,4], index: 2, kind: input, shape index: {}]
  %s3 = inlined_call_operand.vmem [shape: f32[32,256], index: 3, kind: input, shape index: {}]
  %s4 = inlined_call_operand.vmem [shape: f32[32,256], index: 4, kind: input, shape index: {}]
  %s5 = inlined_call_operand.vmem [shape: f32[1,256], index: 5, kind: input, shape index: {}]
  %s6 = inlined_call_operand.vmem [shape: f32[64,32], index: 6, kind: input, shape index: {}]
  %s7 = inlined_call_operand.vmem [shape: f32[1,32], index: 7, kind: input, shape index: {}]
  %s8 = inlined_call_operand.hbm [shape: f32[16,68], index: 8, kind: output, shape index: {}]
  %s9 = sld [smem:[#allocation0]]
  $region42: #{forward.1} parent=0
    _
  %s11 = ssub.s32 1, %s9
  %s12 = scalar_select 0, %s11, %s9
  $region1: #{forward.1} parent=0
    #allocation2 [shape = 'u8[8192]{0}', space=vmem, size = 0x2000, scoped, tag = 'output window, operand 0, single buffered']
    #allocation3 [shape = 's32[1]{0}', space=sflag, size = 0x4, scoped, tag = 'scoped memory for forward.1']
    %13 = vsyncpa [#allocation3], 0
    // Predicated region
    $region2: #{forward.1} parent=1 // pred_check
      _
    $region3: #{forward.1} parent=1 // pred_check_branch
      %15 = sbr.rel (0) target = $region5
    $region4: #{forward.1} parent=1 // pred_region
      _
    $region5: #{forward.1} parent=1 // pred_fallthru
      _
    // Predicated region
    $region6: #{forward.1} parent=1 // pred_check
      _
    $region7: #{forward.1} parent=1 // pred_check_branch
      %17 = sbr.rel (0) target = $region9
    $region8: #{forward.1} parent=1 // pred_region
      _
    $region9: #{forward.1} parent=1 // pred_fallthru
      _
    // Predicated region
    $region10: #{forward.1} parent=1 // pred_check
      _
    $region11: #{forward.1} parent=1 // pred_check_branch
      %19 = sbr.rel (0) target = $region13
    $region12: #{forward.1} parent=1 // pred_region
      _
    $region13: #{forward.1} parent=1 // pred_fallthru
      _
    // Predicated region
    $region14: #{forward.1} parent=1 // pred_check
      _
    $region15: #{forward.1} parent=1 // pred_check_branch
      %21 = sbr.rel (0) target = $region17
    $region16: #{forward.1} parent=1 // pred_region
      _
    $region17: #{forward.1} parent=1 // pred_fallthru
      _
    // Predicated region
    $region18: #{forward.1} parent=1 // pred_check
      _
    $region19: #{forward.1} parent=1 // pred_check_branch
      %23 = sbr.rel (0) target = $region21
    $region20: #{forward.1} parent=1 // pred_region
      _
    $region21: #{forward.1} parent=1 // pred_fallthru
      _
    // Predicated region
    $region22: #{forward.1} parent=1 // pred_check
      _
    $region23: #{forward.1} parent=1 // pred_check_branch
      %25 = sbr.rel (0) target = $region25
    $region24: #{forward.1} parent=1 // pred_region
      _
    $region25: #{forward.1} parent=1 // pred_fallthru
      _
    // Predicated region
    $region26: #{forward.1} parent=1 // pred_check
      _
    $region27: #{forward.1} parent=1 // pred_check_branch
      %27 = sbr.rel (0) target = $region29
    $region28: #{forward.1} parent=1 // pred_region
      _
    $region29: #{forward.1} parent=1 // pred_fallthru
      _
    // Predicated region
    $region30: #{forward.1} parent=1 // pred_check
      _
    $region31: #{forward.1} parent=1 // pred_check_branch
      %29 = sbr.rel (0) target = $region33
    $region32: #{forward.1} parent=1 // pred_region
      _
    $region33: #{forward.1} parent=1 // pred_fallthru
      _
    %v30 = vld [vmem:[%s0] sm:$0xff]
    %v31 = vld [vmem:[%s0 + $0x8] sm:$0xff]
    %v32 = vld [vmem:[%s3] sm:$0xff]
    %v33 = vld [vmem:[%s3 + $0x8] sm:$0xff]
    %v34 = vld [vmem:[%s3 + $0x10] sm:$0xff]
    %v35 = vld [vmem:[%s3 + $0x18] sm:$0xff]
    %v36 = vld [vmem:[%s3 + $0x20] sm:$0xff]
    %v37 = vld [vmem:[%s3 + $0x28] sm:$0xff]
    %v38 = vld [vmem:[%s3 + $0x30] sm:$0xff]
    %v39 = vld [vmem:[%s3 + $0x38] sm:$0xff]
    %v40 = vld [vmem:[%s4] sm:$0xff]
    %v41 = vld [vmem:[%s4 + $0x8] sm:$0xff]
    %v42 = vld [vmem:[%s4 + $0x10] sm:$0xff]
    %v43 = vld [vmem:[%s4 + $0x18] sm:$0xff]
    %v44 = vld [vmem:[%s4 + $0x20] sm:$0xff]
    %v45 = vld [vmem:[%s4 + $0x28] sm:$0xff]
    %v46 = vld [vmem:[%s4 + $0x30] sm:$0xff]
    %v47 = vld [vmem:[%s4 + $0x38] sm:$0xff]
    %v48 = vld [vmem:[%s5] sm:$0x3]
    %v49 = vlaneseq
    %v50 = vshrl.u32 %v49, 7
    %vm51 = vcmp.lt.s32.totalorder %v50, 2
    %v54 = vrot.slane %v31, 7
    %vm55 = vcmask 1041409
    %v56 = vsel %vm55, %v54, %v30
    %v58 = vrot.slane %v30, 5
    %v59 = vrot.slane %v31, 4
    %vm60 = vcmask 1043459
    %v61 = vsel %vm60, %v59, %v58
    %vm63 = vcmask 1041408
    %v64 = vsel %vm63, %v56, %v61
    %vm65 = vcmask 261120
    %v67 = vsel %vm65, 0.0, 0
    %69 = vmatprep.subr.mxu0 %v41
    %70 = vmatpush1.msra.mxu0 %v40
    %71 = vmatprep.subr.mxu0 %v43
    %72 = vmatpush1.msra.mxu0 %v42
    %73 = vmatprep.subr.mxu0 %v45
    %74 = vmatpush1.msra.mxu0 %v44
    %75 = vmatprep.subr.mxu0 %v47
    %76 = vmatpush1.msra.mxu0 %v46
    %77 = vmatprep.subr.mxu0 0.0
    %78 = vmatpush1.msra.mxu0 0.0
    %79 = vmatprep.subr.mxu0 0.0
    %80 = vmatpush1.msra.mxu0 0.0
    %81 = vmatprep.subr.mxu0 0.0
    %82 = vmatpush1.msra.mxu0 0.0
    %83 = vmatprep.subr.mxu0 0.0
    %84 = vmatpush1.msra.mxu0 0.0
    %85 = vmatprep.subr.mxu0 0.0
    %86 = vmatpush1.msra.mxu0 0.0
    %87 = vmatprep.subr.mxu0 0.0
    %88 = vmatpush1.msra.mxu0 0.0
    %89 = vmatprep.subr.mxu0 0.0
    %90 = vmatpush1.msra.mxu0 0.0
    %91 = vmatprep.subr.mxu0 0.0
    %92 = vmatpush1.msra.mxu0 0.0
    %93 = vmatprep.subr.mxu0 0.0
    %94 = vmatpush1.msra.mxu0 0.0
    %95 = vmatprep.subr.mxu0 0.0
    %96 = vmatpush1.msra.mxu0 0.0
    %97 = vmatprep.subr.mxu0 0.0
    %98 = vmatpush1.msra.mxu0 0.0
    %99 = vmatprep.subr.mxu0 0.0
    %100 = vmatpush1.msra.mxu0 0.0
    %101 = vmatprep.subr.mxu0 0.0
    %102 = vmatpush1.msra.mxu0 0.0
    %103 = vmatprep.subr.mxu0 0.0
    %104 = vmatpush1.msra.mxu0 0.0
    %105 = vmatprep.subr.mxu0 0.0
    %106 = vmatpush1.msra.mxu0 0.0
    %107 = vmatprep.subr.mxu0 0.0
    %108 = vmatpush1.msra.mxu0 0.0
    %109 = vmatprep.subr.mxu0 0.0
    %110 = vmatpush1.msra.mxu0 0.0
    %111 = vmatprep.subr.mxu0 0.0
    %112 = vmatpush1.msra.mxu0 0.0
    %113 = vmatprep.subr.mxu0 0.0
    %114 = vmatpush1.msra.mxu0 0.0
    %115 = vmatprep.subr.mxu0 0.0
    %116 = vmatpush1.msra.mxu0 0.0
    %117 = vmatprep.subr.mxu0 0.0
    %118 = vmatpush1.msra.mxu0 0.0
    %119 = vmatprep.subr.mxu0 0.0
    %120 = vmatpush1.msra.mxu0 0.0
    %121 = vmatprep.subr.mxu0 0.0
    %122 = vmatpush1.msra.mxu0 0.0
    %123 = vmatprep.subr.mxu0 0.0
    %124 = vmatpush1.msra.mxu0 0.0
    %125 = vmatprep.subr.mxu0 0.0
    %126 = vmatpush1.msra.mxu0 0.0
    %127 = vmatprep.subr.mxu0 0.0
    %128 = vmatpush1.msra.mxu0 0.0
    %129 = vmatprep.subr.mxu0 0.0
    %130 = vmatpush1.msra.mxu0 0.0
    %131 = vmatprep.subr.mxu0 0.0
    %132 = vmatpush1.msra.mxu0 0.0
    %133 = vmatprep.mubr.f32.mxu0 0.0
    %134 = vmatmul.mubr.f32.gmra.mrb[0].mxu0 %v67
    %v135 = vpop.f32.mrb[0].mxu0
    %v136 = vadd.f32 0.0, %v135
    %v137 = vpop.f32.mrb[0].mxu0
    %v138 = vadd.f32 0.0, %v137
    %139 = vdwg.mxu0
    %v141 = vsel %vm65, %v64, 0
    %143 = vmatprep.subr.mxu0 %v33
    %144 = vmatpush1.msra.mxu0 %v32
    %145 = vmatprep.subr.mxu0 %v35
    %146 = vmatpush1.msra.mxu0 %v34
    %147 = vmatprep.subr.mxu0 %v37
    %148 = vmatpush1.msra.mxu0 %v36
    %149 = vmatprep.subr.mxu0 %v39
    %150 = vmatpush1.msra.mxu0 %v38
    %151 = vmatprep.subr.mxu0 0.0
    %152 = vmatpush1.msra.mxu0 0.0
    %153 = vmatprep.subr.mxu0 0.0
    %154 = vmatpush1.msra.mxu0 0.0
    %155 = vmatprep.subr.mxu0 0.0
    %156 = vmatpush1.msra.mxu0 0.0
    %157 = vmatprep.subr.mxu0 0.0
    %158 = vmatpush1.msra.mxu0 0.0
    %159 = vmatprep.subr.mxu0 0.0
    %160 = vmatpush1.msra.mxu0 0.0
    %161 = vmatprep.subr.mxu0 0.0
    %162 = vmatpush1.msra.mxu0 0.0
    %163 = vmatprep.subr.mxu0 0.0
    %164 = vmatpush1.msra.mxu0 0.0
    %165 = vmatprep.subr.mxu0 0.0
    %166 = vmatpush1.msra.mxu0 0.0
    %167 = vmatprep.subr.mxu0 0.0
    %168 = vmatpush1.msra.mxu0 0.0
    %169 = vmatprep.subr.mxu0 0.0
    %170 = vmatpush1.msra.mxu0 0.0
    %171 = vmatprep.subr.mxu0 0.0
    %172 = vmatpush1.msra.mxu0 0.0
    %173 = vmatprep.subr.mxu0 0.0
    %174 = vmatpush1.msra.mxu0 0.0
    %175 = vmatprep.subr.mxu0 0.0
    %176 = vmatpush1.msra.mxu0 0.0
    %177 = vmatprep.subr.mxu0 0.0
    %178 = vmatpush1.msra.mxu0 0.0
    %179 = vmatprep.subr.mxu0 0.0
    %180 = vmatpush1.msra.mxu0 0.0
    %181 = vmatprep.subr.mxu0 0.0
    %182 = vmatpush1.msra.mxu0 0.0
    %183 = vmatprep.subr.mxu0 0.0
    %184 = vmatpush1.msra.mxu0 0.0
    %185 = vmatprep.subr.mxu0 0.0
    %186 = vmatpush1.msra.mxu0 0.0
    %187 = vmatprep.subr.mxu0 0.0
    %188 = vmatpush1.msra.mxu0 0.0
    %189 = vmatprep.subr.mxu0 0.0
    %190 = vmatpush1.msra.mxu0 0.0
    %191 = vmatprep.subr.mxu0 0.0
    %192 = vmatpush1.msra.mxu0 0.0
    %193 = vmatprep.subr.mxu0 0.0
    %194 = vmatpush1.msra.mxu0 0.0
    %195 = vmatprep.subr.mxu0 0.0
    %196 = vmatpush1.msra.mxu0 0.0
    %197 = vmatprep.subr.mxu0 0.0
    %198 = vmatpush1.msra.mxu0 0.0
    %199 = vmatprep.subr.mxu0 0.0
    %200 = vmatpush1.msra.mxu0 0.0
    %201 = vmatprep.subr.mxu0 0.0
    %202 = vmatpush1.msra.mxu0 0.0
    %203 = vmatprep.subr.mxu0 0.0
    %204 = vmatpush1.msra.mxu0 0.0
    %205 = vmatprep.subr.mxu0 0.0
    %206 = vmatpush1.msra.mxu0 0.0
    %207 = vmatprep.mubr.f32.mxu0 0.0
    %208 = vmatmul.mubr.f32.gmra.mrb[0].mxu0 %v141
    %v209 = vpop.f32.mrb[0].mxu0
    %v210 = vadd.f32 %v136, %v209
    %v211 = vpop.f32.mrb[0].mxu0
    %v212 = vadd.f32 %v138, %v211
    %213 = vdwg.mxu0
    %v215 = vlaneseq
    %v216 = vshrl.u32 %v215, 7
    %v217 = vsub.s32 0, %v216
    %v218 = vrot.slane %v48, %v217
    %v219 = vlaneseq
    %v220 = vshrl.u32 %v219, 7
    %v221 = vsub.s32 1, %v220
    %v222 = vrot.slane %v48, %v221
    %v225 = vadd.f32 %v210, %v218
    %v226 = vadd.f32 %v212, %v222
    %v227 = vsel %vm51, %v225, %v226
    %v228 = vxor.u32 %v227, 2147483648
    %v229 = vmul.f32 %v228, 1.442695
    %v230 = vpow.pop %v229
    %v231 = vadd.f32 %v230, 1.0
    %v232 = vrcp.pop %v231
    %v233 = vmul.f32 1.0, %v232
    %v234 = vtanh.pop %v227
    %v235 = vmul.f32 %v233, 0.0
    %237 = vrot.lane.b32.xlu0 %v234, 64
    %v238 = vpop.permute.xlu0 %237
    %v240 = vmul.f32 %v233, %v238
    %242 = vrot.lane.b32.xlu0 %v240, 32
    %v243 = vpop.permute.xlu0 %242
    %v245 = vadd.f32 %v235, %v243
    %v246 = vtanh.pop %v245
    %248 = vrot.lane.b32.xlu0 %v246, 64
    %v249 = vpop.permute.xlu0 %248
    %v251 = vmul.f32 %v233, %v249
    %v252 = vrot.slane %v30, 1
    %v253 = vsel %vm55, %v31, %v252
    %v255 = vrot.slane %v30, 4
    %v256 = vrot.slane %v31, 3
    %v257 = vsel %vm60, %v256, %v255
    %v259 = vsel %vm63, %v253, %v257
    %261 = vrot.lane.b32.xlu0 %v251, 32
    %v262 = vpop.permute.xlu0 %261
    %v263 = vsel %vm65, %v262, 0
    %265 = vmatprep.subr.mxu0 %v41
    %266 = vmatpush1.msra.mxu0 %v40
    %267 = vmatprep.subr.mxu0 %v43
    %268 = vmatpush1.msra.mxu0 %v42
    %269 = vmatprep.subr.mxu0 %v45
    %270 = vmatpush1.msra.mxu0 %v44
    %271 = vmatprep.subr.mxu0 %v47
    %272 = vmatpush1.msra.mxu0 %v46
    %273 = vmatprep.subr.mxu0 0.0
    %274 = vmatpush1.msra.mxu0 0.0
    %275 = vmatprep.subr.mxu0 0.0
    %276 = vmatpush1.msra.mxu0 0.0
    %277 = vmatprep.subr.mxu0 0.0
    %278 = vmatpush1.msra.mxu0 0.0
    %279 = vmatprep.subr.mxu0 0.0
    %280 = vmatpush1.msra.mxu0 0.0
    %281 = vmatprep.subr.mxu0 0.0
    %282 = vmatpush1.msra.mxu0 0.0
    %283 = vmatprep.subr.mxu0 0.0
    %284 = vmatpush1.msra.mxu0 0.0
    %285 = vmatprep.subr.mxu0 0.0
    %286 = vmatpush1.msra.mxu0 0.0
    %287 = vmatprep.subr.mxu0 0.0
    %288 = vmatpush1.msra.mxu0 0.0
    %289 = vmatprep.subr.mxu0 0.0
    %290 = vmatpush1.msra.mxu0 0.0
    %291 = vmatprep.subr.mxu0 0.0
    %292 = vmatpush1.msra.mxu0 0.0
    %293 = vmatprep.subr.mxu0 0.0
    %294 = vmatpush1.msra.mxu0 0.0
    %295 = vmatprep.subr.mxu0 0.0
    %296 = vmatpush1.msra.mxu0 0.0
    %297 = vmatprep.subr.mxu0 0.0
    %298 = vmatpush1.msra.mxu0 0.0
    %299 = vmatprep.subr.mxu0 0.0
    %300 = vmatpush1.msra.mxu0 0.0
    %301 = vmatprep.subr.mxu0 0.0
    %302 = vmatpush1.msra.mxu0 0.0
    %303 = vmatprep.subr.mxu0 0.0
    %304 = vmatpush1.msra.mxu0 0.0
    %305 = vmatprep.subr.mxu0 0.0
    %306 = vmatpush1.msra.mxu0 0.0
    %307 = vmatprep.subr.mxu0 0.0
    %308 = vmatpush1.msra.mxu0 0.0
    %309 = vmatprep.subr.mxu0 0.0
    %310 = vmatpush1.msra.mxu0 0.0
    %311 = vmatprep.subr.mxu0 0.0
    %312 = vmatpush1.msra.mxu0 0.0
    %313 = vmatprep.subr.mxu0 0.0
    %314 = vmatpush1.msra.mxu0 0.0
    %315 = vmatprep.subr.mxu0 0.0
    %316 = vmatpush1.msra.mxu0 0.0
    %317 = vmatprep.subr.mxu0 0.0
    %318 = vmatpush1.msra.mxu0 0.0
    %319 = vmatprep.subr.mxu0 0.0
    %320 = vmatpush1.msra.mxu0 0.0
    %321 = vmatprep.subr.mxu0 0.0
    %322 = vmatpush1.msra.mxu0 0.0
    %323 = vmatprep.subr.mxu0 0.0
    %324 = vmatpush1.msra.mxu0 0.0
    %325 = vmatprep.subr.mxu0 0.0
    %326 = vmatpush1.msra.mxu0 0.0
    %327 = vmatprep.subr.mxu0 0.0
    %328 = vmatpush1.msra.mxu0 0.0
    %329 = vmatprep.mubr.f32.mxu0 0.0
    %330 = vmatmul.mubr.f32.gmra.mrb[0].mxu0 %v263
    %v331 = vpop.f32.mrb[0].mxu0
    %v332 = vadd.f32 0.0, %v331
    %v333 = vpop.f32.mrb[0].mxu0
    %v334 = vadd.f32 0.0, %v333
    %335 = vdwg.mxu0
    %v337 = vsel %vm65, %v259, 0
    %339 = vmatprep.subr.mxu0 %v33
    %340 = vmatpush1.msra.mxu0 %v32
    %341 = vmatprep.subr.mxu0 %v35
    %342 = vmatpush1.msra.mxu0 %v34
    %343 = vmatprep.subr.mxu0 %v37
    %344 = vmatpush1.msra.mxu0 %v36
    %345 = vmatprep.subr.mxu0 %v39
    %346 = vmatpush1.msra.mxu0 %v38
    %347 = vmatprep.subr.mxu0 0.0
    %348 = vmatpush1.msra.mxu0 0.0
    %349 = vmatprep.subr.mxu0 0.0
    %350 = vmatpush1.msra.mxu0 0.0
    %351 = vmatprep.subr.mxu0 0.0
    %352 = vmatpush1.msra.mxu0 0.0
    %353 = vmatprep.subr.mxu0 0.0
    %354 = vmatpush1.msra.mxu0 0.0
    %355 = vmatprep.subr.mxu0 0.0
    %356 = vmatpush1.msra.mxu0 0.0
    %357 = vmatprep.subr.mxu0 0.0
    %358 = vmatpush1.msra.mxu0 0.0
    %359 = vmatprep.subr.mxu0 0.0
    %360 = vmatpush1.msra.mxu0 0.0
    %361 = vmatprep.subr.mxu0 0.0
    %362 = vmatpush1.msra.mxu0 0.0
    %363 = vmatprep.subr.mxu0 0.0
    %364 = vmatpush1.msra.mxu0 0.0
    %365 = vmatprep.subr.mxu0 0.0
    %366 = vmatpush1.msra.mxu0 0.0
    %367 = vmatprep.subr.mxu0 0.0
    %368 = vmatpush1.msra.mxu0 0.0
    %369 = vmatprep.subr.mxu0 0.0
    %370 = vmatpush1.msra.mxu0 0.0
    %371 = vmatprep.subr.mxu0 0.0
    %372 = vmatpush1.msra.mxu0 0.0
    %373 = vmatprep.subr.mxu0 0.0
    %374 = vmatpush1.msra.mxu0 0.0
    %375 = vmatprep.subr.mxu0 0.0
    %376 = vmatpush1.msra.mxu0 0.0
    %377 = vmatprep.subr.mxu0 0.0
    %378 = vmatpush1.msra.mxu0 0.0
    %379 = vmatprep.subr.mxu0 0.0
    %380 = vmatpush1.msra.mxu0 0.0
    %381 = vmatprep.subr.mxu0 0.0
    %382 = vmatpush1.msra.mxu0 0.0
    %383 = vmatprep.subr.mxu0 0.0
    %384 = vmatpush1.msra.mxu0 0.0
    %385 = vmatprep.subr.mxu0 0.0
    %386 = vmatpush1.msra.mxu0 0.0
    %387 = vmatprep.subr.mxu0 0.0
    %388 = vmatpush1.msra.mxu0 0.0
    %389 = vmatprep.subr.mxu0 0.0
    %390 = vmatpush1.msra.mxu0 0.0
    %391 = vmatprep.subr.mxu0 0.0
    %392 = vmatpush1.msra.mxu0 0.0
    %393 = vmatprep.subr.mxu0 0.0
    %394 = vmatpush1.msra.mxu0 0.0
    %395 = vmatprep.subr.mxu0 0.0
    %396 = vmatpush1.msra.mxu0 0.0
    %397 = vmatprep.subr.mxu0 0.0
    %398 = vmatpush1.msra.mxu0 0.0
    %399 = vmatprep.subr.mxu0 0.0
    %400 = vmatpush1.msra.mxu0 0.0
    %401 = vmatprep.subr.mxu0 0.0
    %402 = vmatpush1.msra.mxu0 0.0
    %403 = vmatprep.mubr.f32.mxu0 0.0
    %404 = vmatmul.mubr.f32.gmra.mrb[0].mxu0 %v337
    %v405 = vpop.f32.mrb[0].mxu0
    %v406 = vadd.f32 %v332, %v405
    %v407 = vpop.f32.mrb[0].mxu0
    %v408 = vadd.f32 %v334, %v407
    %409 = vdwg.mxu0
    %v410 = vadd.f32 %v406, %v218
    %v411 = vadd.f32 %v408, %v222
    %v412 = vsel %vm51, %v410, %v411
    %v413 = vxor.u32 %v412, 2147483648
    %v414 = vmul.f32 %v413, 1.442695
    %v415 = vpow.pop %v414
    %v416 = vadd.f32 %v415, 1.0
    %v417 = vrcp.pop %v416
    %v418 = vmul.f32 1.0, %v417
    %v419 = vtanh.pop %v412
    %v420 = vmul.f32 %v418, %v245
    %422 = vrot.lane.b32.xlu0 %v419, 64
    %v423 = vpop.permute.xlu0 %422
    %v425 = vmul.f32 %v418, %v423
    %427 = vrot.lane.b32.xlu0 %v425, 32
    %v428 = vpop.permute.xlu0 %427
    %v430 = vadd.f32 %v420, %v428
    %v431 = vtanh.pop %v430
    %433 = vrot.lane.b32.xlu0 %v431, 64
    %v434 = vpop.permute.xlu0 %433
    %v436 = vmul.f32 %v418, %v434
    %v437 = vrot.slane %v30, 2
    %v438 = vrot.slane %v31, 1
    %v439 = vsel %vm55, %v438, %v437
    %v441 = vrot.slane %v30, 3
    %v442 = vrot.slane %v31, 2
    %v443 = vsel %vm60, %v442, %v441
    %v445 = vsel %vm63, %v439, %v443
    %447 = vrot.lane.b32.xlu0 %v436, 32
    %v448 = vpop.permute.xlu0 %447
    %v449 = vsel %vm65, %v448, 0
    %451 = vmatprep.subr.mxu0 %v41
    %452 = vmatpush1.msra.mxu0 %v40
    %453 = vmatprep.subr.mxu0 %v43
    %454 = vmatpush1.msra.mxu0 %v42
    %455 = vmatprep.subr.mxu0 %v45
    %456 = vmatpush1.msra.mxu0 %v44
    %457 = vmatprep.subr.mxu0 %v47
    %458 = vmatpush1.msra.mxu0 %v46
    %459 = vmatprep.subr.mxu0 0.0
    %460 = vmatpush1.msra.mxu0 0.0
    %461 = vmatprep.subr.mxu0 0.0
    %462 = vmatpush1.msra.mxu0 0.0
    %463 = vmatprep.subr.mxu0 0.0
    %464 = vmatpush1.msra.mxu0 0.0
    %465 = vmatprep.subr.mxu0 0.0
    %466 = vmatpush1.msra.mxu0 0.0
    %467 = vmatprep.subr.mxu0 0.0
    %468 = vmatpush1.msra.mxu0 0.0
    %469 = vmatprep.subr.mxu0 0.0
    %470 = vmatpush1.msra.mxu0 0.0
    %471 = vmatprep.subr.mxu0 0.0
    %472 = vmatpush1.msra.mxu0 0.0
    %473 = vmatprep.subr.mxu0 0.0
    %474 = vmatpush1.msra.mxu0 0.0
    %475 = vmatprep.subr.mxu0 0.0
    %476 = vmatpush1.msra.mxu0 0.0
    %477 = vmatprep.subr.mxu0 0.0
    %478 = vmatpush1.msra.mxu0 0.0
    %479 = vmatprep.subr.mxu0 0.0
    %480 = vmatpush1.msra.mxu0 0.0
    %481 = vmatprep.subr.mxu0 0.0
    %482 = vmatpush1.msra.mxu0 0.0
    %483 = vmatprep.subr.mxu0 0.0
    %484 = vmatpush1.msra.mxu0 0.0
    %485 = vmatprep.subr.mxu0 0.0
    %486 = vmatpush1.msra.mxu0 0.0
    %487 = vmatprep.subr.mxu0 0.0
    %488 = vmatpush1.msra.mxu0 0.0
    %489 = vmatprep.subr.mxu0 0.0
    %490 = vmatpush1.msra.mxu0 0.0
    %491 = vmatprep.subr.mxu0 0.0
    %492 = vmatpush1.msra.mxu0 0.0
    %493 = vmatprep.subr.mxu0 0.0
    %494 = vmatpush1.msra.mxu0 0.0
    %495 = vmatprep.subr.mxu0 0.0
    %496 = vmatpush1.msra.mxu0 0.0
    %497 = vmatprep.subr.mxu0 0.0
    %498 = vmatpush1.msra.mxu0 0.0
    %499 = vmatprep.subr.mxu0 0.0
    %500 = vmatpush1.msra.mxu0 0.0
    %501 = vmatprep.subr.mxu0 0.0
    %502 = vmatpush1.msra.mxu0 0.0
    %503 = vmatprep.subr.mxu0 0.0
    %504 = vmatpush1.msra.mxu0 0.0
    %505 = vmatprep.subr.mxu0 0.0
    %506 = vmatpush1.msra.mxu0 0.0
    %507 = vmatprep.subr.mxu0 0.0
    %508 = vmatpush1.msra.mxu0 0.0
    %509 = vmatprep.subr.mxu0 0.0
    %510 = vmatpush1.msra.mxu0 0.0
    %511 = vmatprep.subr.mxu0 0.0
    %512 = vmatpush1.msra.mxu0 0.0
    %513 = vmatprep.subr.mxu0 0.0
    %514 = vmatpush1.msra.mxu0 0.0
    %515 = vmatprep.mubr.f32.mxu0 0.0
    %516 = vmatmul.mubr.f32.gmra.mrb[0].mxu0 %v449
    %v517 = vpop.f32.mrb[0].mxu0
    %v518 = vadd.f32 0.0, %v517
    %v519 = vpop.f32.mrb[0].mxu0
    %v520 = vadd.f32 0.0, %v519
    %521 = vdwg.mxu0
    %v523 = vsel %vm65, %v445, 0
    %525 = vmatprep.subr.mxu0 %v33
    %526 = vmatpush1.msra.mxu0 %v32
    %527 = vmatprep.subr.mxu0 %v35
    %528 = vmatpush1.msra.mxu0 %v34
    %529 = vmatprep.subr.mxu0 %v37
    %530 = vmatpush1.msra.mxu0 %v36
    %531 = vmatprep.subr.mxu0 %v39
    %532 = vmatpush1.msra.mxu0 %v38
    %533 = vmatprep.subr.mxu0 0.0
    %534 = vmatpush1.msra.mxu0 0.0
    %535 = vmatprep.subr.mxu0 0.0
    %536 = vmatpush1.msra.mxu0 0.0
    %537 = vmatprep.subr.mxu0 0.0
    %538 = vmatpush1.msra.mxu0 0.0
    %539 = vmatprep.subr.mxu0 0.0
    %540 = vmatpush1.msra.mxu0 0.0
    %541 = vmatprep.subr.mxu0 0.0
    %542 = vmatpush1.msra.mxu0 0.0
    %543 = vmatprep.subr.mxu0 0.0
    %544 = vmatpush1.msra.mxu0 0.0
    %545 = vmatprep.subr.mxu0 0.0
    %546 = vmatpush1.msra.mxu0 0.0
    %547 = vmatprep.subr.mxu0 0.0
    %548 = vmatpush1.msra.mxu0 0.0
    %549 = vmatprep.subr.mxu0 0.0
    %550 = vmatpush1.msra.mxu0 0.0
    %551 = vmatprep.subr.mxu0 0.0
    %552 = vmatpush1.msra.mxu0 0.0
    %553 = vmatprep.subr.mxu0 0.0
    %554 = vmatpush1.msra.mxu0 0.0
    %555 = vmatprep.subr.mxu0 0.0
    %556 = vmatpush1.msra.mxu0 0.0
    %557 = vmatprep.subr.mxu0 0.0
    %558 = vmatpush1.msra.mxu0 0.0
    %559 = vmatprep.subr.mxu0 0.0
    %560 = vmatpush1.msra.mxu0 0.0
    %561 = vmatprep.subr.mxu0 0.0
    %562 = vmatpush1.msra.mxu0 0.0
    %563 = vmatprep.subr.mxu0 0.0
    %564 = vmatpush1.msra.mxu0 0.0
    %565 = vmatprep.subr.mxu0 0.0
    %566 = vmatpush1.msra.mxu0 0.0
    %567 = vmatprep.subr.mxu0 0.0
    %568 = vmatpush1.msra.mxu0 0.0
    %569 = vmatprep.subr.mxu0 0.0
    %570 = vmatpush1.msra.mxu0 0.0
    %571 = vmatprep.subr.mxu0 0.0
    %572 = vmatpush1.msra.mxu0 0.0
    %573 = vmatprep.subr.mxu0 0.0
    %574 = vmatpush1.msra.mxu0 0.0
    %575 = vmatprep.subr.mxu0 0.0
    %576 = vmatpush1.msra.mxu0 0.0
    %577 = vmatprep.subr.mxu0 0.0
    %578 = vmatpush1.msra.mxu0 0.0
    %579 = vmatprep.subr.mxu0 0.0
    %580 = vmatpush1.msra.mxu0 0.0
    %581 = vmatprep.subr.mxu0 0.0
    %582 = vmatpush1.msra.mxu0 0.0
    %583 = vmatprep.subr.mxu0 0.0
    %584 = vmatpush1.msra.mxu0 0.0
    %585 = vmatprep.subr.mxu0 0.0
    %586 = vmatpush1.msra.mxu0 0.0
    %587 = vmatprep.subr.mxu0 0.0
    %588 = vmatpush1.msra.mxu0 0.0
    %589 = vmatprep.mubr.f32.mxu0 0.0
    %590 = vmatmul.mubr.f32.gmra.mrb[0].mxu0 %v523
    %v591 = vpop.f32.mrb[0].mxu0
    %v592 = vadd.f32 %v518, %v591
    %v593 = vpop.f32.mrb[0].mxu0
    %v594 = vadd.f32 %v520, %v593
    %595 = vdwg.mxu0
    %v596 = vadd.f32 %v592, %v218
    %v597 = vadd.f32 %v594, %v222
    %v598 = vsel %vm51, %v596, %v597
    %v599 = vxor.u32 %v598, 2147483648
    %v600 = vmul.f32 %v599, 1.442695
    %v601 = vpow.pop %v600
    %v602 = vadd.f32 %v601, 1.0
    %v603 = vrcp.pop %v602
    %v604 = vmul.f32 1.0, %v603
    %v605 = vtanh.pop %v598
    %v606 = vmul.f32 %v604, %v430
    %608 = vrot.lane.b32.xlu0 %v605, 64
    %v609 = vpop.permute.xlu0 %608
    %v611 = vmul.f32 %v604, %v609
    %613 = vrot.lane.b32.xlu0 %v611, 32
    %v614 = vpop.permute.xlu0 %613
    %v616 = vadd.f32 %v606, %v614
    %v617 = vtanh.pop %v616
    %619 = vrot.lane.b32.xlu0 %v617, 64
    %v620 = vpop.permute.xlu0 %619
    %v622 = vmul.f32 %v604, %v620
    %v623 = vsel %vm55, %v442, %v441
    %v625 = vsel %vm60, %v438, %v437
    %v627 = vsel %vm63, %v623, %v625
    %629 = vrot.lane.b32.xlu0 %v622, 32
    %v630 = vpop.permute.xlu0 %629
    %v631 = vsel %vm65, %v630, 0
    %633 = vmatprep.subr.mxu0 %v41
    %634 = vmatpush1.msra.mxu0 %v40
    %635 = vmatprep.subr.mxu0 %v43
    %636 = vmatpush1.msra.mxu0 %v42
    %637 = vmatprep.subr.mxu0 %v45
    %638 = vmatpush1.msra.mxu0 %v44
    %639 = vmatprep.subr.mxu0 %v47
    %640 = vmatpush1.msra.mxu0 %v46
    %641 = vmatprep.subr.mxu0 0.0
    %642 = vmatpush1.msra.mxu0 0.0
    %643 = vmatprep.subr.mxu0 0.0
    %644 = vmatpush1.msra.mxu0 0.0
    %645 = vmatprep.subr.mxu0 0.0
    %646 = vmatpush1.msra.mxu0 0.0
    %647 = vmatprep.subr.mxu0 0.0
    %648 = vmatpush1.msra.mxu0 0.0
    %649 = vmatprep.subr.mxu0 0.0
    %650 = vmatpush1.msra.mxu0 0.0
    %651 = vmatprep.subr.mxu0 0.0
    %652 = vmatpush1.msra.mxu0 0.0
    %653 = vmatprep.subr.mxu0 0.0
    %654 = vmatpush1.msra.mxu0 0.0
    %655 = vmatprep.subr.mxu0 0.0
    %656 = vmatpush1.msra.mxu0 0.0
    %657 = vmatprep.subr.mxu0 0.0
    %658 = vmatpush1.msra.mxu0 0.0
    %659 = vmatprep.subr.mxu0 0.0
    %660 = vmatpush1.msra.mxu0 0.0
    %661 = vmatprep.subr.mxu0 0.0
    %662 = vmatpush1.msra.mxu0 0.0
    %663 = vmatprep.subr.mxu0 0.0
    %664 = vmatpush1.msra.mxu0 0.0
    %665 = vmatprep.subr.mxu0 0.0
    %666 = vmatpush1.msra.mxu0 0.0
    %667 = vmatprep.subr.mxu0 0.0
    %668 = vmatpush1.msra.mxu0 0.0
    %669 = vmatprep.subr.mxu0 0.0
    %670 = vmatpush1.msra.mxu0 0.0
    %671 = vmatprep.subr.mxu0 0.0
    %672 = vmatpush1.msra.mxu0 0.0
    %673 = vmatprep.subr.mxu0 0.0
    %674 = vmatpush1.msra.mxu0 0.0
    %675 = vmatprep.subr.mxu0 0.0
    %676 = vmatpush1.msra.mxu0 0.0
    %677 = vmatprep.subr.mxu0 0.0
    %678 = vmatpush1.msra.mxu0 0.0
    %679 = vmatprep.subr.mxu0 0.0
    %680 = vmatpush1.msra.mxu0 0.0
    %681 = vmatprep.subr.mxu0 0.0
    %682 = vmatpush1.msra.mxu0 0.0
    %683 = vmatprep.subr.mxu0 0.0
    %684 = vmatpush1.msra.mxu0 0.0
    %685 = vmatprep.subr.mxu0 0.0
    %686 = vmatpush1.msra.mxu0 0.0
    %687 = vmatprep.subr.mxu0 0.0
    %688 = vmatpush1.msra.mxu0 0.0
    %689 = vmatprep.subr.mxu0 0.0
    %690 = vmatpush1.msra.mxu0 0.0
    %691 = vmatprep.subr.mxu0 0.0
    %692 = vmatpush1.msra.mxu0 0.0
    %693 = vmatprep.subr.mxu0 0.0
    %694 = vmatpush1.msra.mxu0 0.0
    %695 = vmatprep.subr.mxu0 0.0
    %696 = vmatpush1.msra.mxu0 0.0
    %697 = vmatprep.mubr.f32.mxu0 0.0
    %698 = vmatmul.mubr.f32.gmra.mrb[0].mxu0 %v631
    %v699 = vpop.f32.mrb[0].mxu0
    %v700 = vadd.f32 0.0, %v699
    %v701 = vpop.f32.mrb[0].mxu0
    %v702 = vadd.f32 0.0, %v701
    %703 = vdwg.mxu0
    %v705 = vsel %vm65, %v627, 0
    %707 = vmatprep.subr.mxu0 %v33
    %708 = vmatpush1.msra.mxu0 %v32
    %709 = vmatprep.subr.mxu0 %v35
    %710 = vmatpush1.msra.mxu0 %v34
    %711 = vmatprep.subr.mxu0 %v37
    %712 = vmatpush1.msra.mxu0 %v36
    %713 = vmatprep.subr.mxu0 %v39
    %714 = vmatpush1.msra.mxu0 %v38
    %715 = vmatprep.subr.mxu0 0.0
    %716 = vmatpush1.msra.mxu0 0.0
    %717 = vmatprep.subr.mxu0 0.0
    %718 = vmatpush1.msra.mxu0 0.0
    %719 = vmatprep.subr.mxu0 0.0
    %720 = vmatpush1.msra.mxu0 0.0
    %721 = vmatprep.subr.mxu0 0.0
    %722 = vmatpush1.msra.mxu0 0.0
    %723 = vmatprep.subr.mxu0 0.0
    %724 = vmatpush1.msra.mxu0 0.0
    %725 = vmatprep.subr.mxu0 0.0
    %726 = vmatpush1.msra.mxu0 0.0
    %727 = vmatprep.subr.mxu0 0.0
    %728 = vmatpush1.msra.mxu0 0.0
    %729 = vmatprep.subr.mxu0 0.0
    %730 = vmatpush1.msra.mxu0 0.0
    %731 = vmatprep.subr.mxu0 0.0
    %732 = vmatpush1.msra.mxu0 0.0
    %733 = vmatprep.subr.mxu0 0.0
    %734 = vmatpush1.msra.mxu0 0.0
    %735 = vmatprep.subr.mxu0 0.0
    %736 = vmatpush1.msra.mxu0 0.0
    %737 = vmatprep.subr.mxu0 0.0
    %738 = vmatpush1.msra.mxu0 0.0
    %739 = vmatprep.subr.mxu0 0.0
    %740 = vmatpush1.msra.mxu0 0.0
    %741 = vmatprep.subr.mxu0 0.0
    %742 = vmatpush1.msra.mxu0 0.0
    %743 = vmatprep.subr.mxu0 0.0
    %744 = vmatpush1.msra.mxu0 0.0
    %745 = vmatprep.subr.mxu0 0.0
    %746 = vmatpush1.msra.mxu0 0.0
    %747 = vmatprep.subr.mxu0 0.0
    %748 = vmatpush1.msra.mxu0 0.0
    %749 = vmatprep.subr.mxu0 0.0
    %750 = vmatpush1.msra.mxu0 0.0
    %751 = vmatprep.subr.mxu0 0.0
    %752 = vmatpush1.msra.mxu0 0.0
    %753 = vmatprep.subr.mxu0 0.0
    %754 = vmatpush1.msra.mxu0 0.0
    %755 = vmatprep.subr.mxu0 0.0
    %756 = vmatpush1.msra.mxu0 0.0
    %757 = vmatprep.subr.mxu0 0.0
    %758 = vmatpush1.msra.mxu0 0.0
    %759 = vmatprep.subr.mxu0 0.0
    %760 = vmatpush1.msra.mxu0 0.0
    %761 = vmatprep.subr.mxu0 0.0
    %762 = vmatpush1.msra.mxu0 0.0
    %763 = vmatprep.subr.mxu0 0.0
    %764 = vmatpush1.msra.mxu0 0.0
    %765 = vmatprep.subr.mxu0 0.0
    %766 = vmatpush1.msra.mxu0 0.0
    %767 = vmatprep.subr.mxu0 0.0
    %768 = vmatpush1.msra.mxu0 0.0
    %769 = vmatprep.subr.mxu0 0.0
    %770 = vmatpush1.msra.mxu0 0.0
    %771 = vmatprep.mubr.f32.mxu0 0.0
    %772 = vmatmul.mubr.f32.gmra.mrb[0].mxu0 %v705
    %v773 = vpop.f32.mrb[0].mxu0
    %v774 = vadd.f32 %v700, %v773
    %v775 = vpop.f32.mrb[0].mxu0
    %v776 = vadd.f32 %v702, %v775
    %777 = vdwg.mxu0
    %v778 = vadd.f32 %v774, %v218
    %v779 = vadd.f32 %v776, %v222
    %v780 = vsel %vm51, %v778, %v779
    %v781 = vxor.u32 %v780, 2147483648
    %v782 = vmul.f32 %v781, 1.442695
    %v783 = vpow.pop %v782
    %v784 = vadd.f32 %v783, 1.0
    %v785 = vrcp.pop %v784
    %v786 = vmul.f32 1.0, %v785
    %v787 = vtanh.pop %v780
    %v788 = vmul.f32 %v786, %v616
    %790 = vrot.lane.b32.xlu0 %v787, 64
    %v791 = vpop.permute.xlu0 %790
    %v793 = vmul.f32 %v786, %v791
    %795 = vrot.lane.b32.xlu0 %v793, 32
    %v796 = vpop.permute.xlu0 %795
    %v798 = vadd.f32 %v788, %v796
    %v799 = vtanh.pop %v798
    %801 = vrot.lane.b32.xlu0 %v799, 64
    %v802 = vpop.permute.xlu0 %801
    %v804 = vmul.f32 %v786, %v802
    %v805 = vsel %vm55, %v256, %v255
    %v807 = vsel %vm60, %v31, %v252
    %v809 = vsel %vm63, %v805, %v807
    %811 = vrot.lane.b32.xlu0 %v804, 32
    %v812 = vpop.permute.xlu0 %811
    %v813 = vsel %vm65, %v812, 0
    %815 = vmatprep.subr.mxu0 %v41
    %816 = vmatpush1.msra.mxu0 %v40
    %817 = vmatprep.subr.mxu0 %v43
    %818 = vmatpush1.msra.mxu0 %v42
    %819 = vmatprep.subr.mxu0 %v45
    %820 = vmatpush1.msra.mxu0 %v44
    %821 = vmatprep.subr.mxu0 %v47
    %822 = vmatpush1.msra.mxu0 %v46
    %823 = vmatprep.subr.mxu0 0.0
    %824 = vmatpush1.msra.mxu0 0.0
    %825 = vmatprep.subr.mxu0 0.0
    %826 = vmatpush1.msra.mxu0 0.0
    %827 = vmatprep.subr.mxu0 0.0
    %828 = vmatpush1.msra.mxu0 0.0
    %829 = vmatprep.subr.mxu0 0.0
    %830 = vmatpush1.msra.mxu0 0.0
    %831 = vmatprep.subr.mxu0 0.0
    %832 = vmatpush1.msra.mxu0 0.0
    %833 = vmatprep.subr.mxu0 0.0
    %834 = vmatpush1.msra.mxu0 0.0
    %835 = vmatprep.subr.mxu0 0.0
    %836 = vmatpush1.msra.mxu0 0.0
    %837 = vmatprep.subr.mxu0 0.0
    %838 = vmatpush1.msra.mxu0 0.0
    %839 = vmatprep.subr.mxu0 0.0
    %840 = vmatpush1.msra.mxu0 0.0
    %841 = vmatprep.subr.mxu0 0.0
    %842 = vmatpush1.msra.mxu0 0.0
    %843 = vmatprep.subr.mxu0 0.0
    %844 = vmatpush1.msra.mxu0 0.0
    %845 = vmatprep.subr.mxu0 0.0
    %846 = vmatpush1.msra.mxu0 0.0
    %847 = vmatprep.subr.mxu0 0.0
    %848 = vmatpush1.msra.mxu0 0.0
    %849 = vmatprep.subr.mxu0 0.0
    %850 = vmatpush1.msra.mxu0 0.0
    %851 = vmatprep.subr.mxu0 0.0
    %852 = vmatpush1.msra.mxu0 0.0
    %853 = vmatprep.subr.mxu0 0.0
    %854 = vmatpush1.msra.mxu0 0.0
    %855 = vmatprep.subr.mxu0 0.0
    %856 = vmatpush1.msra.mxu0 0.0
    %857 = vmatprep.subr.mxu0 0.0
    %858 = vmatpush1.msra.mxu0 0.0
    %859 = vmatprep.subr.mxu0 0.0
    %860 = vmatpush1.msra.mxu0 0.0
    %861 = vmatprep.subr.mxu0 0.0
    %862 = vmatpush1.msra.mxu0 0.0
    %863 = vmatprep.subr.mxu0 0.0
    %864 = vmatpush1.msra.mxu0 0.0
    %865 = vmatprep.subr.mxu0 0.0
    %866 = vmatpush1.msra.mxu0 0.0
    %867 = vmatprep.subr.mxu0 0.0
    %868 = vmatpush1.msra.mxu0 0.0
    %869 = vmatprep.subr.mxu0 0.0
    %870 = vmatpush1.msra.mxu0 0.0
    %871 = vmatprep.subr.mxu0 0.0
    %872 = vmatpush1.msra.mxu0 0.0
    %873 = vmatprep.subr.mxu0 0.0
    %874 = vmatpush1.msra.mxu0 0.0
    %875 = vmatprep.subr.mxu0 0.0
    %876 = vmatpush1.msra.mxu0 0.0
    %877 = vmatprep.subr.mxu0 0.0
    %878 = vmatpush1.msra.mxu0 0.0
    %879 = vmatprep.mubr.f32.mxu0 0.0
    %880 = vmatmul.mubr.f32.gmra.mrb[0].mxu0 %v813
    %v881 = vpop.f32.mrb[0].mxu0
    %v882 = vadd.f32 0.0, %v881
    %v883 = vpop.f32.mrb[0].mxu0
    %v884 = vadd.f32 0.0, %v883
    %885 = vdwg.mxu0
    %v887 = vsel %vm65, %v809, 0
    %889 = vmatprep.subr.mxu0 %v33
    %890 = vmatpush1.msra.mxu0 %v32
    %891 = vmatprep.subr.mxu0 %v35
    %892 = vmatpush1.msra.mxu0 %v34
    %893 = vmatprep.subr.mxu0 %v37
    %894 = vmatpush1.msra.mxu0 %v36
    %895 = vmatprep.subr.mxu0 %v39
    %896 = vmatpush1.msra.mxu0 %v38
    %897 = vmatprep.subr.mxu0 0.0
    %898 = vmatpush1.msra.mxu0 0.0
    %899 = vmatprep.subr.mxu0 0.0
    %900 = vmatpush1.msra.mxu0 0.0
    %901 = vmatprep.subr.mxu0 0.0
    %902 = vmatpush1.msra.mxu0 0.0
    %903 = vmatprep.subr.mxu0 0.0
    %904 = vmatpush1.msra.mxu0 0.0
    %905 = vmatprep.subr.mxu0 0.0
    %906 = vmatpush1.msra.mxu0 0.0
    %907 = vmatprep.subr.mxu0 0.0
    %908 = vmatpush1.msra.mxu0 0.0
    %909 = vmatprep.subr.mxu0 0.0
    %910 = vmatpush1.msra.mxu0 0.0
    %911 = vmatprep.subr.mxu0 0.0
    %912 = vmatpush1.msra.mxu0 0.0
    %913 = vmatprep.subr.mxu0 0.0
    %914 = vmatpush1.msra.mxu0 0.0
    %915 = vmatprep.subr.mxu0 0.0
    %916 = vmatpush1.msra.mxu0 0.0
    %917 = vmatprep.subr.mxu0 0.0
    %918 = vmatpush1.msra.mxu0 0.0
    %919 = vmatprep.subr.mxu0 0.0
    %920 = vmatpush1.msra.mxu0 0.0
    %921 = vmatprep.subr.mxu0 0.0
    %922 = vmatpush1.msra.mxu0 0.0
    %923 = vmatprep.subr.mxu0 0.0
    %924 = vmatpush1.msra.mxu0 0.0
    %925 = vmatprep.subr.mxu0 0.0
    %926 = vmatpush1.msra.mxu0 0.0
    %927 = vmatprep.subr.mxu0 0.0
    %928 = vmatpush1.msra.mxu0 0.0
    %929 = vmatprep.subr.mxu0 0.0
    %930 = vmatpush1.msra.mxu0 0.0
    %931 = vmatprep.subr.mxu0 0.0
    %932 = vmatpush1.msra.mxu0 0.0
    %933 = vmatprep.subr.mxu0 0.0
    %934 = vmatpush1.msra.mxu0 0.0
    %935 = vmatprep.subr.mxu0 0.0
    %936 = vmatpush1.msra.mxu0 0.0
    %937 = vmatprep.subr.mxu0 0.0
    %938 = vmatpush1.msra.mxu0 0.0
    %939 = vmatprep.subr.mxu0 0.0
    %940 = vmatpush1.msra.mxu0 0.0
    %941 = vmatprep.subr.mxu0 0.0
    %942 = vmatpush1.msra.mxu0 0.0
    %943 = vmatprep.subr.mxu0 0.0
    %944 = vmatpush1.msra.mxu0 0.0
    %945 = vmatprep.subr.mxu0 0.0
    %946 = vmatpush1.msra.mxu0 0.0
    %947 = vmatprep.subr.mxu0 0.0
    %948 = vmatpush1.msra.mxu0 0.0
    %949 = vmatprep.subr.mxu0 0.0
    %950 = vmatpush1.msra.mxu0 0.0
    %951 = vmatprep.subr.mxu0 0.0
    %952 = vmatpush1.msra.mxu0 0.0
    %953 = vmatprep.mubr.f32.mxu0 0.0
    %954 = vmatmul.mubr.f32.gmra.mrb[0].mxu0 %v887
    %v955 = vpop.f32.mrb[0].mxu0
    %v956 = vadd.f32 %v882, %v955
    %v957 = vpop.f32.mrb[0].mxu0
    %v958 = vadd.f32 %v884, %v957
    %959 = vdwg.mxu0
    %v960 = vadd.f32 %v956, %v218
    %v961 = vadd.f32 %v958, %v222
    %v962 = vsel %vm51, %v960, %v961
    %v963 = vxor.u32 %v962, 2147483648
    %v964 = vmul.f32 %v963, 1.442695
    %v965 = vpow.pop %v964
    %v966 = vadd.f32 %v965, 1.0
    %v967 = vrcp.pop %v966
    %v968 = vmul.f32 1.0, %v967
    %v969 = vtanh.pop %v962
    %v970 = vmul.f32 %v968, %v798
    %972 = vrot.lane.b32.xlu0 %v969, 64
    %v973 = vpop.permute.xlu0 %972
    %v975 = vmul.f32 %v968, %v973
    %977 = vrot.lane.b32.xlu0 %v975, 32
    %v978 = vpop.permute.xlu0 %977
    %v980 = vadd.f32 %v970, %v978
    %v981 = vtanh.pop %v980
    %983 = vrot.lane.b32.xlu0 %v981, 64
    %v984 = vpop.permute.xlu0 %983
    %v986 = vmul.f32 %v968, %v984
    %v987 = vsel %vm55, %v59, %v58
    %v989 = vsel %vm60, %v54, %v30
    %v991 = vsel %vm63, %v987, %v989
    %993 = vrot.lane.b32.xlu0 %v986, 32
    %v994 = vpop.permute.xlu0 %993
    %v995 = vsel %vm65, %v994, 0
    %997 = vmatprep.subr.mxu0 %v41
    %998 = vmatpush1.msra.mxu0 %v40
    %999 = vmatprep.subr.mxu0 %v43
    %1000 = vmatpush1.msra.mxu0 %v42
    %1001 = vmatprep.subr.mxu0 %v45
    %1002 = vmatpush1.msra.mxu0 %v44
    %1003 = vmatprep.subr.mxu0 %v47
    %1004 = vmatpush1.msra.mxu0 %v46
    %1005 = vmatprep.subr.mxu0 0.0
    %1006 = vmatpush1.msra.mxu0 0.0
    %1007 = vmatprep.subr.mxu0 0.0
    %1008 = vmatpush1.msra.mxu0 0.0
    %1009 = vmatprep.subr.mxu0 0.0
    %1010 = vmatpush1.msra.mxu0 0.0
    %1011 = vmatprep.subr.mxu0 0.0
    %1012 = vmatpush1.msra.mxu0 0.0
    %1013 = vmatprep.subr.mxu0 0.0
    %1014 = vmatpush1.msra.mxu0 0.0
    %1015 = vmatprep.subr.mxu0 0.0
    %1016 = vmatpush1.msra.mxu0 0.0
    %1017 = vmatprep.subr.mxu0 0.0
    %1018 = vmatpush1.msra.mxu0 0.0
    %1019 = vmatprep.subr.mxu0 0.0
    %1020 = vmatpush1.msra.mxu0 0.0
    %1021 = vmatprep.subr.mxu0 0.0
    %1022 = vmatpush1.msra.mxu0 0.0
    %1023 = vmatprep.subr.mxu0 0.0
    %1024 = vmatpush1.msra.mxu0 0.0
    %1025 = vmatprep.subr.mxu0 0.0
    %1026 = vmatpush1.msra.mxu0 0.0
    %1027 = vmatprep.subr.mxu0 0.0
    %1028 = vmatpush1.msra.mxu0 0.0
    %1029 = vmatprep.subr.mxu0 0.0
    %1030 = vmatpush1.msra.mxu0 0.0
    %1031 = vmatprep.subr.mxu0 0.0
    %1032 = vmatpush1.msra.mxu0 0.0
    %1033 = vmatprep.subr.mxu0 0.0
    %1034 = vmatpush1.msra.mxu0 0.0
    %1035 = vmatprep.subr.mxu0 0.0
    %1036 = vmatpush1.msra.mxu0 0.0
    %1037 = vmatprep.subr.mxu0 0.0
    %1038 = vmatpush1.msra.mxu0 0.0
    %1039 = vmatprep.subr.mxu0 0.0
    %1040 = vmatpush1.msra.mxu0 0.0
    %1041 = vmatprep.subr.mxu0 0.0
    %1042 = vmatpush1.msra.mxu0 0.0
    %1043 = vmatprep.subr.mxu0 0.0
    %1044 = vmatpush1.msra.mxu0 0.0
    %1045 = vmatprep.subr.mxu0 0.0
    %1046 = vmatpush1.msra.mxu0 0.0
    %1047 = vmatprep.subr.mxu0 0.0
    %1048 = vmatpush1.msra.mxu0 0.0
    %1049 = vmatprep.subr.mxu0 0.0
    %1050 = vmatpush1.msra.mxu0 0.0
    %1051 = vmatprep.subr.mxu0 0.0
    %1052 = vmatpush1.msra.mxu0 0.0
    %1053 = vmatprep.subr.mxu0 0.0
    %1054 = vmatpush1.msra.mxu0 0.0
    %1055 = vmatprep.subr.mxu0 0.0
    %1056 = vmatpush1.msra.mxu0 0.0
    %1057 = vmatprep.subr.mxu0 0.0
    %1058 = vmatpush1.msra.mxu0 0.0
    %1059 = vmatprep.subr.mxu0 0.0
    %1060 = vmatpush1.msra.mxu0 0.0
    %1061 = vmatprep.mubr.f32.mxu0 0.0
    %1062 = vmatmul.mubr.f32.gmra.mrb[0].mxu0 %v995
    %v1063 = vpop.f32.mrb[0].mxu0
    %v1064 = vadd.f32 0.0, %v1063
    %v1065 = vpop.f32.mrb[0].mxu0
    %v1066 = vadd.f32 0.0, %v1065
    %1067 = vdwg.mxu0
    %v1069 = vsel %vm65, %v991, 0
    %1071 = vmatprep.subr.mxu0 %v33
    %1072 = vmatpush1.msra.mxu0 %v32
    %1073 = vmatprep.subr.mxu0 %v35
    %1074 = vmatpush1.msra.mxu0 %v34
    %1075 = vmatprep.subr.mxu0 %v37
    %1076 = vmatpush1.msra.mxu0 %v36
    %1077 = vmatprep.subr.mxu0 %v39
    %1078 = vmatpush1.msra.mxu0 %v38
    %1079 = vmatprep.subr.mxu0 0.0
    %1080 = vmatpush1.msra.mxu0 0.0
    %1081 = vmatprep.subr.mxu0 0.0
    %1082 = vmatpush1.msra.mxu0 0.0
    %1083 = vmatprep.subr.mxu0 0.0
    %1084 = vmatpush1.msra.mxu0 0.0
    %1085 = vmatprep.subr.mxu0 0.0
    %1086 = vmatpush1.msra.mxu0 0.0
    %1087 = vmatprep.subr.mxu0 0.0
    %1088 = vmatpush1.msra.mxu0 0.0
    %1089 = vmatprep.subr.mxu0 0.0
    %1090 = vmatpush1.msra.mxu0 0.0
    %1091 = vmatprep.subr.mxu0 0.0
    %1092 = vmatpush1.msra.mxu0 0.0
    %1093 = vmatprep.subr.mxu0 0.0
    %1094 = vmatpush1.msra.mxu0 0.0
    %1095 = vmatprep.subr.mxu0 0.0
    %1096 = vmatpush1.msra.mxu0 0.0
    %1097 = vmatprep.subr.mxu0 0.0
    %1098 = vmatpush1.msra.mxu0 0.0
    %1099 = vmatprep.subr.mxu0 0.0
    %1100 = vmatpush1.msra.mxu0 0.0
    %1101 = vmatprep.subr.mxu0 0.0
    %1102 = vmatpush1.msra.mxu0 0.0
    %1103 = vmatprep.subr.mxu0 0.0
    %1104 = vmatpush1.msra.mxu0 0.0
    %1105 = vmatprep.subr.mxu0 0.0
    %1106 = vmatpush1.msra.mxu0 0.0
    %1107 = vmatprep.subr.mxu0 0.0
    %1108 = vmatpush1.msra.mxu0 0.0
    %1109 = vmatprep.subr.mxu0 0.0
    %1110 = vmatpush1.msra.mxu0 0.0
    %1111 = vmatprep.subr.mxu0 0.0
    %1112 = vmatpush1.msra.mxu0 0.0
    %1113 = vmatprep.subr.mxu0 0.0
    %1114 = vmatpush1.msra.mxu0 0.0
    %1115 = vmatprep.subr.mxu0 0.0
    %1116 = vmatpush1.msra.mxu0 0.0
    %1117 = vmatprep.subr.mxu0 0.0
    %1118 = vmatpush1.msra.mxu0 0.0
    %1119 = vmatprep.subr.mxu0 0.0
    %1120 = vmatpush1.msra.mxu0 0.0
    %1121 = vmatprep.subr.mxu0 0.0
    %1122 = vmatpush1.msra.mxu0 0.0
    %1123 = vmatprep.subr.mxu0 0.0
    %1124 = vmatpush1.msra.mxu0 0.0
    %1125 = vmatprep.subr.mxu0 0.0
    %1126 = vmatpush1.msra.mxu0 0.0
    %1127 = vmatprep.subr.mxu0 0.0
    %1128 = vmatpush1.msra.mxu0 0.0
    %1129 = vmatprep.subr.mxu0 0.0
    %1130 = vmatpush1.msra.mxu0 0.0
    %1131 = vmatprep.subr.mxu0 0.0
    %1132 = vmatpush1.msra.mxu0 0.0
    %1133 = vmatprep.subr.mxu0 0.0
    %1134 = vmatpush1.msra.mxu0 0.0
    %1135 = vmatprep.mubr.f32.mxu0 0.0
    %1136 = vmatmul.mubr.f32.gmra.mrb[0].mxu0 %v1069
    %v1137 = vpop.f32.mrb[0].mxu0
    %v1138 = vadd.f32 %v1064, %v1137
    %v1139 = vpop.f32.mrb[0].mxu0
    %v1140 = vadd.f32 %v1066, %v1139
    %1141 = vdwg.mxu0
    %v1142 = vadd.f32 %v1138, %v218
    %v1143 = vadd.f32 %v1140, %v222
    %v1144 = vsel %vm51, %v1142, %v1143
    %v1145 = vxor.u32 %v1144, 2147483648
    %v1146 = vmul.f32 %v1145, 1.442695
    %v1147 = vpow.pop %v1146
    %v1148 = vadd.f32 %v1147, 1.0
    %v1149 = vrcp.pop %v1148
    %v1150 = vmul.f32 1.0, %v1149
    %v1151 = vtanh.pop %v1144
    %v1152 = vmul.f32 %v1150, %v980
    %1154 = vrot.lane.b32.xlu0 %v1151, 64
    %v1155 = vpop.permute.xlu0 %1154
    %v1157 = vmul.f32 %v1150, %v1155
    %1159 = vrot.lane.b32.xlu0 %v1157, 32
    %v1160 = vpop.permute.xlu0 %1159
    %v1162 = vadd.f32 %v1152, %v1160
    %v1163 = vtanh.pop %v1162
    %1165 = vrot.lane.b32.xlu0 %v1163, 64
    %v1166 = vpop.permute.xlu0 %1165
    %v1168 = vmul.f32 %v1150, %v1166
    %v1169 = vrot.slane %v30, 6
    %v1170 = vrot.slane %v31, 5
    %v1171 = vsel %vm55, %v1170, %v1169
    %v1173 = vrot.slane %v30, 7
    %v1174 = vrot.slane %v31, 6
    %v1175 = vsel %vm60, %v1174, %v1173
    %v1177 = vsel %vm63, %v1171, %v1175
    %1179 = vrot.lane.b32.xlu0 %v1168, 32
    %v1180 = vpop.permute.xlu0 %1179
    %v1181 = vsel %vm65, %v1180, 0
    %1183 = vmatprep.subr.mxu0 %v41
    %1184 = vmatpush1.msra.mxu0 %v40
    %1185 = vmatprep.subr.mxu0 %v43
    %1186 = vmatpush1.msra.mxu0 %v42
    %1187 = vmatprep.subr.mxu0 %v45
    %1188 = vmatpush1.msra.mxu0 %v44
    %1189 = vmatprep.subr.mxu0 %v47
    %1190 = vmatpush1.msra.mxu0 %v46
    %1191 = vmatprep.subr.mxu0 0.0
    %1192 = vmatpush1.msra.mxu0 0.0
    %1193 = vmatprep.subr.mxu0 0.0
    %1194 = vmatpush1.msra.mxu0 0.0
    %1195 = vmatprep.subr.mxu0 0.0
    %1196 = vmatpush1.msra.mxu0 0.0
    %1197 = vmatprep.subr.mxu0 0.0
    %1198 = vmatpush1.msra.mxu0 0.0
    %1199 = vmatprep.subr.mxu0 0.0
    %1200 = vmatpush1.msra.mxu0 0.0
    %1201 = vmatprep.subr.mxu0 0.0
    %1202 = vmatpush1.msra.mxu0 0.0
    %1203 = vmatprep.subr.mxu0 0.0
    %1204 = vmatpush1.msra.mxu0 0.0
    %1205 = vmatprep.subr.mxu0 0.0
    %1206 = vmatpush1.msra.mxu0 0.0
    %1207 = vmatprep.subr.mxu0 0.0
    %1208 = vmatpush1.msra.mxu0 0.0
    %1209 = vmatprep.subr.mxu0 0.0
    %1210 = vmatpush1.msra.mxu0 0.0
    %1211 = vmatprep.subr.mxu0 0.0
    %1212 = vmatpush1.msra.mxu0 0.0
    %1213 = vmatprep.subr.mxu0 0.0
    %1214 = vmatpush1.msra.mxu0 0.0
    %1215 = vmatprep.subr.mxu0 0.0
    %1216 = vmatpush1.msra.mxu0 0.0
    %1217 = vmatprep.subr.mxu0 0.0
    %1218 = vmatpush1.msra.mxu0 0.0
    %1219 = vmatprep.subr.mxu0 0.0
    %1220 = vmatpush1.msra.mxu0 0.0
    %1221 = vmatprep.subr.mxu0 0.0
    %1222 = vmatpush1.msra.mxu0 0.0
    %1223 = vmatprep.subr.mxu0 0.0
    %1224 = vmatpush1.msra.mxu0 0.0
    %1225 = vmatprep.subr.mxu0 0.0
    %1226 = vmatpush1.msra.mxu0 0.0
    %1227 = vmatprep.subr.mxu0 0.0
    %1228 = vmatpush1.msra.mxu0 0.0
    %1229 = vmatprep.subr.mxu0 0.0
    %1230 = vmatpush1.msra.mxu0 0.0
    %1231 = vmatprep.subr.mxu0 0.0
    %1232 = vmatpush1.msra.mxu0 0.0
    %1233 = vmatprep.subr.mxu0 0.0
    %1234 = vmatpush1.msra.mxu0 0.0
    %1235 = vmatprep.subr.mxu0 0.0
    %1236 = vmatpush1.msra.mxu0 0.0
    %1237 = vmatprep.subr.mxu0 0.0
    %1238 = vmatpush1.msra.mxu0 0.0
    %1239 = vmatprep.subr.mxu0 0.0
    %1240 = vmatpush1.msra.mxu0 0.0
    %1241 = vmatprep.subr.mxu0 0.0
    %1242 = vmatpush1.msra.mxu0 0.0
    %1243 = vmatprep.subr.mxu0 0.0
    %1244 = vmatpush1.msra.mxu0 0.0
    %1245 = vmatprep.subr.mxu0 0.0
    %1246 = vmatpush1.msra.mxu0 0.0
    %1247 = vmatprep.mubr.f32.mxu0 0.0
    %1248 = vmatmul.mubr.f32.gmra.mrb[0].mxu0 %v1181
    %v1249 = vpop.f32.mrb[0].mxu0
    %v1250 = vadd.f32 0.0, %v1249
    %v1251 = vpop.f32.mrb[0].mxu0
    %v1252 = vadd.f32 0.0, %v1251
    %1253 = vdwg.mxu0
    %v1255 = vsel %vm65, %v1177, 0
    %1257 = vmatprep.subr.mxu0 %v33
    %1258 = vmatpush1.msra.mxu0 %v32
    %1259 = vmatprep.subr.mxu0 %v35
    %1260 = vmatpush1.msra.mxu0 %v34
    %1261 = vmatprep.subr.mxu0 %v37
    %1262 = vmatpush1.msra.mxu0 %v36
    %1263 = vmatprep.subr.mxu0 %v39
    %1264 = vmatpush1.msra.mxu0 %v38
    %1265 = vmatprep.subr.mxu0 0.0
    %1266 = vmatpush1.msra.mxu0 0.0
    %1267 = vmatprep.subr.mxu0 0.0
    %1268 = vmatpush1.msra.mxu0 0.0
    %1269 = vmatprep.subr.mxu0 0.0
    %1270 = vmatpush1.msra.mxu0 0.0
    %1271 = vmatprep.subr.mxu0 0.0
    %1272 = vmatpush1.msra.mxu0 0.0
    %1273 = vmatprep.subr.mxu0 0.0
    %1274 = vmatpush1.msra.mxu0 0.0
    %1275 = vmatprep.subr.mxu0 0.0
    %1276 = vmatpush1.msra.mxu0 0.0
    %1277 = vmatprep.subr.mxu0 0.0
    %1278 = vmatpush1.msra.mxu0 0.0
    %1279 = vmatprep.subr.mxu0 0.0
    %1280 = vmatpush1.msra.mxu0 0.0
    %1281 = vmatprep.subr.mxu0 0.0
    %1282 = vmatpush1.msra.mxu0 0.0
    %1283 = vmatprep.subr.mxu0 0.0
    %1284 = vmatpush1.msra.mxu0 0.0
    %1285 = vmatprep.subr.mxu0 0.0
    %1286 = vmatpush1.msra.mxu0 0.0
    %1287 = vmatprep.subr.mxu0 0.0
    %1288 = vmatpush1.msra.mxu0 0.0
    %1289 = vmatprep.subr.mxu0 0.0
    %1290 = vmatpush1.msra.mxu0 0.0
    %1291 = vmatprep.subr.mxu0 0.0
    %1292 = vmatpush1.msra.mxu0 0.0
    %1293 = vmatprep.subr.mxu0 0.0
    %1294 = vmatpush1.msra.mxu0 0.0
    %1295 = vmatprep.subr.mxu0 0.0
    %1296 = vmatpush1.msra.mxu0 0.0
    %1297 = vmatprep.subr.mxu0 0.0
    %1298 = vmatpush1.msra.mxu0 0.0
    %1299 = vmatprep.subr.mxu0 0.0
    %1300 = vmatpush1.msra.mxu0 0.0
    %1301 = vmatprep.subr.mxu0 0.0
    %1302 = vmatpush1.msra.mxu0 0.0
    %1303 = vmatprep.subr.mxu0 0.0
    %1304 = vmatpush1.msra.mxu0 0.0
    %1305 = vmatprep.subr.mxu0 0.0
    %1306 = vmatpush1.msra.mxu0 0.0
    %1307 = vmatprep.subr.mxu0 0.0
    %1308 = vmatpush1.msra.mxu0 0.0
    %1309 = vmatprep.subr.mxu0 0.0
    %1310 = vmatpush1.msra.mxu0 0.0
    %1311 = vmatprep.subr.mxu0 0.0
    %1312 = vmatpush1.msra.mxu0 0.0
    %1313 = vmatprep.subr.mxu0 0.0
    %1314 = vmatpush1.msra.mxu0 0.0
    %1315 = vmatprep.subr.mxu0 0.0
    %1316 = vmatpush1.msra.mxu0 0.0
    %1317 = vmatprep.subr.mxu0 0.0
    %1318 = vmatpush1.msra.mxu0 0.0
    %1319 = vmatprep.subr.mxu0 0.0
    %1320 = vmatpush1.msra.mxu0 0.0
    %1321 = vmatprep.mubr.f32.mxu0 0.0
    %1322 = vmatmul.mubr.f32.gmra.mrb[0].mxu0 %v1255
    %v1323 = vpop.f32.mrb[0].mxu0
    %v1324 = vadd.f32 %v1250, %v1323
    %v1325 = vpop.f32.mrb[0].mxu0
    %v1326 = vadd.f32 %v1252, %v1325
    %1327 = vdwg.mxu0
    %v1328 = vadd.f32 %v1324, %v218
    %v1329 = vadd.f32 %v1326, %v222
    %v1330 = vsel %vm51, %v1328, %v1329
    %v1331 = vxor.u32 %v1330, 2147483648
    %v1332 = vmul.f32 %v1331, 1.442695
    %v1333 = vpow.pop %v1332
    %v1334 = vadd.f32 %v1333, 1.0
    %v1335 = vrcp.pop %v1334
    %v1336 = vmul.f32 1.0, %v1335
    %v1337 = vtanh.pop %v1330
    %v1338 = vmul.f32 %v1336, %v1162
    %1340 = vrot.lane.b32.xlu0 %v1337, 64
    %v1341 = vpop.permute.xlu0 %1340
    %v1343 = vmul.f32 %v1336, %v1341
    %1345 = vrot.lane.b32.xlu0 %v1343, 32
    %v1346 = vpop.permute.xlu0 %1345
    %v1348 = vadd.f32 %v1338, %v1346
    %v1349 = vtanh.pop %v1348
    %1351 = vrot.lane.b32.xlu0 %v1349, 64
    %v1352 = vpop.permute.xlu0 %1351
    %v1354 = vmul.f32 %v1336, %v1352
    %v1355 = vsel %vm55, %v1174, %v1173
    %v1357 = vsel %vm60, %v1170, %v1169
    %v1359 = vsel %vm63, %v1355, %v1357
    %1361 = vrot.lane.b32.xlu0 %v1354, 32
    %v1362 = vpop.permute.xlu0 %1361
    %v1363 = vsel %vm65, %v1362, 0
    %1365 = vmatprep.subr.mxu0 %v41
    %1366 = vmatpush1.msra.mxu0 %v40
    %1367 = vmatprep.subr.mxu0 %v43
    %1368 = vmatpush1.msra.mxu0 %v42
    %1369 = vmatprep.subr.mxu0 %v45
    %1370 = vmatpush1.msra.mxu0 %v44
    %1371 = vmatprep.subr.mxu0 %v47
    %1372 = vmatpush1.msra.mxu0 %v46
    %1373 = vmatprep.subr.mxu0 0.0
    %1374 = vmatpush1.msra.mxu0 0.0
    %1375 = vmatprep.subr.mxu0 0.0
    %1376 = vmatpush1.msra.mxu0 0.0
    %1377 = vmatprep.subr.mxu0 0.0
    %1378 = vmatpush1.msra.mxu0 0.0
    %1379 = vmatprep.subr.mxu0 0.0
    %1380 = vmatpush1.msra.mxu0 0.0
    %1381 = vmatprep.subr.mxu0 0.0
    %1382 = vmatpush1.msra.mxu0 0.0
    %1383 = vmatprep.subr.mxu0 0.0
    %1384 = vmatpush1.msra.mxu0 0.0
    %1385 = vmatprep.subr.mxu0 0.0
    %1386 = vmatpush1.msra.mxu0 0.0
    %1387 = vmatprep.subr.mxu0 0.0
    %1388 = vmatpush1.msra.mxu0 0.0
    %1389 = vmatprep.subr.mxu0 0.0
    %1390 = vmatpush1.msra.mxu0 0.0
    %1391 = vmatprep.subr.mxu0 0.0
    %1392 = vmatpush1.msra.mxu0 0.0
    %1393 = vmatprep.subr.mxu0 0.0
    %1394 = vmatpush1.msra.mxu0 0.0
    %1395 = vmatprep.subr.mxu0 0.0
    %1396 = vmatpush1.msra.mxu0 0.0
    %1397 = vmatprep.subr.mxu0 0.0
    %1398 = vmatpush1.msra.mxu0 0.0
    %1399 = vmatprep.subr.mxu0 0.0
    %1400 = vmatpush1.msra.mxu0 0.0
    %1401 = vmatprep.subr.mxu0 0.0
    %1402 = vmatpush1.msra.mxu0 0.0
    %1403 = vmatprep.subr.mxu0 0.0
    %1404 = vmatpush1.msra.mxu0 0.0
    %1405 = vmatprep.subr.mxu0 0.0
    %1406 = vmatpush1.msra.mxu0 0.0
    %1407 = vmatprep.subr.mxu0 0.0
    %1408 = vmatpush1.msra.mxu0 0.0
    %1409 = vmatprep.subr.mxu0 0.0
    %1410 = vmatpush1.msra.mxu0 0.0
    %1411 = vmatprep.subr.mxu0 0.0
    %1412 = vmatpush1.msra.mxu0 0.0
    %1413 = vmatprep.subr.mxu0 0.0
    %1414 = vmatpush1.msra.mxu0 0.0
    %1415 = vmatprep.subr.mxu0 0.0
    %1416 = vmatpush1.msra.mxu0 0.0
    %1417 = vmatprep.subr.mxu0 0.0
    %1418 = vmatpush1.msra.mxu0 0.0
    %1419 = vmatprep.subr.mxu0 0.0
    %1420 = vmatpush1.msra.mxu0 0.0
    %1421 = vmatprep.subr.mxu0 0.0
    %1422 = vmatpush1.msra.mxu0 0.0
    %1423 = vmatprep.subr.mxu0 0.0
    %1424 = vmatpush1.msra.mxu0 0.0
    %1425 = vmatprep.subr.mxu0 0.0
    %1426 = vmatpush1.msra.mxu0 0.0
    %1427 = vmatprep.subr.mxu0 0.0
    %1428 = vmatpush1.msra.mxu0 0.0
    %1429 = vmatprep.mubr.f32.mxu0 0.0
    %1430 = vmatmul.mubr.f32.gmra.mrb[0].mxu0 %v1363
    %v1431 = vpop.f32.mrb[0].mxu0
    %v1432 = vadd.f32 0.0, %v1431
    %v1433 = vpop.f32.mrb[0].mxu0
    %v1434 = vadd.f32 0.0, %v1433
    %1435 = vdwg.mxu0
    %v1437 = vsel %vm65, %v1359, 0
    %1439 = vmatprep.subr.mxu0 %v33
    %1440 = vmatpush1.msra.mxu0 %v32
    %1441 = vmatprep.subr.mxu0 %v35
    %1442 = vmatpush1.msra.mxu0 %v34
    %1443 = vmatprep.subr.mxu0 %v37
    %1444 = vmatpush1.msra.mxu0 %v36
    %1445 = vmatprep.subr.mxu0 %v39
    %1446 = vmatpush1.msra.mxu0 %v38
    %1447 = vmatprep.subr.mxu0 0.0
    %1448 = vmatpush1.msra.mxu0 0.0
    %1449 = vmatprep.subr.mxu0 0.0
    %1450 = vmatpush1.msra.mxu0 0.0
    %1451 = vmatprep.subr.mxu0 0.0
    %1452 = vmatpush1.msra.mxu0 0.0
    %1453 = vmatprep.subr.mxu0 0.0
    %1454 = vmatpush1.msra.mxu0 0.0
    %1455 = vmatprep.subr.mxu0 0.0
    %1456 = vmatpush1.msra.mxu0 0.0
    %1457 = vmatprep.subr.mxu0 0.0
    %1458 = vmatpush1.msra.mxu0 0.0
    %1459 = vmatprep.subr.mxu0 0.0
    %1460 = vmatpush1.msra.mxu0 0.0
    %1461 = vmatprep.subr.mxu0 0.0
    %1462 = vmatpush1.msra.mxu0 0.0
    %1463 = vmatprep.subr.mxu0 0.0
    %1464 = vmatpush1.msra.mxu0 0.0
    %1465 = vmatprep.subr.mxu0 0.0
    %1466 = vmatpush1.msra.mxu0 0.0
    %1467 = vmatprep.subr.mxu0 0.0
    %1468 = vmatpush1.msra.mxu0 0.0
    %1469 = vmatprep.subr.mxu0 0.0
    %1470 = vmatpush1.msra.mxu0 0.0
    %1471 = vmatprep.subr.mxu0 0.0
    %1472 = vmatpush1.msra.mxu0 0.0
    %1473 = vmatprep.subr.mxu0 0.0
    %1474 = vmatpush1.msra.mxu0 0.0
    %1475 = vmatprep.subr.mxu0 0.0
    %1476 = vmatpush1.msra.mxu0 0.0
    %1477 = vmatprep.subr.mxu0 0.0
    %1478 = vmatpush1.msra.mxu0 0.0
    %1479 = vmatprep.subr.mxu0 0.0
    %1480 = vmatpush1.msra.mxu0 0.0
    %1481 = vmatprep.subr.mxu0 0.0
    %1482 = vmatpush1.msra.mxu0 0.0
    %1483 = vmatprep.subr.mxu0 0.0
    %1484 = vmatpush1.msra.mxu0 0.0
    %1485 = vmatprep.subr.mxu0 0.0
    %1486 = vmatpush1.msra.mxu0 0.0
    %1487 = vmatprep.subr.mxu0 0.0
    %1488 = vmatpush1.msra.mxu0 0.0
    %1489 = vmatprep.subr.mxu0 0.0
    %1490 = vmatpush1.msra.mxu0 0.0
    %1491 = vmatprep.subr.mxu0 0.0
    %1492 = vmatpush1.msra.mxu0 0.0
    %1493 = vmatprep.subr.mxu0 0.0
    %1494 = vmatpush1.msra.mxu0 0.0
    %1495 = vmatprep.subr.mxu0 0.0
    %1496 = vmatpush1.msra.mxu0 0.0
    %1497 = vmatprep.subr.mxu0 0.0
    %1498 = vmatpush1.msra.mxu0 0.0
    %1499 = vmatprep.subr.mxu0 0.0
    %1500 = vmatpush1.msra.mxu0 0.0
    %1501 = vmatprep.subr.mxu0 0.0
    %1502 = vmatpush1.msra.mxu0 0.0
    %1503 = vmatprep.mubr.f32.mxu0 0.0
    %1504 = vmatmul.mubr.f32.gmra.mrb[0].mxu0 %v1437
    %v1505 = vpop.f32.mrb[0].mxu0
    %v1506 = vadd.f32 %v1432, %v1505
    %v1507 = vpop.f32.mrb[0].mxu0
    %v1508 = vadd.f32 %v1434, %v1507
    %1509 = vdwg.mxu0
    %v1510 = vadd.f32 %v1506, %v218
    %v1511 = vadd.f32 %v1508, %v222
    %v1512 = vsel %vm51, %v1510, %v1511
    %v1513 = vxor.u32 %v1512, 2147483648
    %v1514 = vmul.f32 %v1513, 1.442695
    %v1515 = vpow.pop %v1514
    %v1516 = vadd.f32 %v1515, 1.0
    %v1517 = vrcp.pop %v1516
    %v1518 = vmul.f32 1.0, %v1517
    %v1519 = vtanh.pop %v1512
    %v1520 = vmul.f32 %v1518, %v1348
    %1522 = vrot.lane.b32.xlu0 %v1519, 64
    %v1523 = vpop.permute.xlu0 %1522
    %v1525 = vmul.f32 %v1518, %v1523
    %1527 = vrot.lane.b32.xlu0 %v1525, 32
    %v1528 = vpop.permute.xlu0 %1527
    %v1530 = vadd.f32 %v1520, %v1528
    %v1531 = vtanh.pop %v1530
    %1533 = vrot.lane.b32.xlu0 %v1531, 64
    %v1534 = vpop.permute.xlu0 %1533
    %v1536 = vmul.f32 %v1518, %v1534
    %v1538 = vrot.slane %v1536, 2
    %v1540 = vadd.f32 %v251, %v1538
    %v1541 = vrot.slane %v1354, 2
    %v1543 = vadd.f32 %v436, %v1541
    %v1544 = vrot.slane %v1168, 2
    %v1546 = vadd.f32 %v622, %v1544
    %v1547 = vrot.slane %v986, 2
    %v1549 = vadd.f32 %v804, %v1547
    %v1550 = vrot.slane %v804, 2
    %v1552 = vadd.f32 %v986, %v1550
    %v1553 = vrot.slane %v622, 2
    %v1555 = vadd.f32 %v1168, %v1553
    %v1556 = vrot.slane %v436, 2
    %v1558 = vadd.f32 %v1354, %v1556
    %v1559 = vrot.slane %v251, 2
    %v1561 = vadd.f32 %v1536, %v1559
    %v1563 = vrot.slane %v1543, 7
    %v1566 = vrot.slane %v1546, 6
    %v1569 = vrot.slane %v1549, 5
    %v1572 = vrot.slane %v1552, 4
    %v1575 = vrot.slane %v1555, 3
    %v1578 = vrot.slane %v1558, 2
    %v1581 = vrot.slane %v1561, 1
    %v1584 = vrot.slane %v1540, 1
    %v1586 = vrot.slane %v1546, 7
    %v1588 = vrot.slane %v1549, 6
    %v1590 = vrot.slane %v1552, 5
    %v1592 = vrot.slane %v1555, 4
    %v1594 = vrot.slane %v1558, 3
    %v1596 = vrot.slane %v1561, 2
    %vm1598 = vcmask 1040384
    %v1599 = vsel %vm1598, %v1540, %v1563
    %v1600 = vsel %vm63, %v1599, %v1566
    %vm1601 = vcmask 1042432
    %v1602 = vsel %vm1601, %v1600, %v1569
    %vm1603 = vcmask 1043456
    %v1604 = vsel %vm1603, %v1602, %v1572
    %vm1605 = vcmask 1044480
    %v1606 = vsel %vm1605, %v1604, %v1575
    %vm1607 = vcmask 1045504
    %v1608 = vsel %vm1607, %v1606, %v1578
    %vm1609 = vcmask 1046528
    %v1610 = vsel %vm1609, %v1608, %v1581
    %v1611 = vsel %vm1598, %v1584, %v1543
    %v1612 = vsel %vm63, %v1611, %v1586
    %v1613 = vsel %vm1601, %v1612, %v1588
    %v1614 = vsel %vm1603, %v1613, %v1590
    %v1615 = vsel %vm1605, %v1614, %v1592
    %v1616 = vsel %vm1607, %v1615, %v1594
    %v1617 = vsel %vm1609, %v1616, %v1596
    %v1618 = vld [vmem:[%s1] sm:$0xff]
    %v1619 = vld [vmem:[%s1 + $0x8] sm:$0xff]
    %v1620 = vld [vmem:[%s1 + $0x10] sm:$0xff]
    %v1621 = vld [vmem:[%s1 + $0x18] sm:$0xff]
    %v1622 = vld [vmem:[%s1 + $0x20] sm:$0xff]
    %v1623 = vld [vmem:[%s1 + $0x28] sm:$0xff]
    %v1624 = vld [vmem:[%s1 + $0x30] sm:$0xff]
    %v1625 = vld [vmem:[%s1 + $0x38] sm:$0xff]
    %v1626 = vld [vmem:[%s6] sm:$0xff]
    %v1627 = vld [vmem:[%s6 + $0x8] sm:$0xff]
    %v1628 = vld [vmem:[%s6 + $0x10] sm:$0xff]
    %v1629 = vld [vmem:[%s6 + $0x18] sm:$0xff]
    %v1630 = vld [vmem:[%s6 + $0x20] sm:$0xff]
    %v1631 = vld [vmem:[%s6 + $0x28] sm:$0xff]
    %v1632 = vld [vmem:[%s6 + $0x30] sm:$0xff]
    %v1633 = vld [vmem:[%s6 + $0x38] sm:$0xff]
    %v1634 = vld [vmem:[%s7] sm:$0x1]
    %v1635 = vld [vmem:[%s2] sm:$0xff]
    %v1636 = vld [vmem:[%s2 + $0x8] sm:$0xff]
    %v1638 = vlaneseq
    %v1639 = vshrl.u32 %v1638, 7
    %v1640 = vsub.s32 0, %v1639
    %v1641 = vrot.slane %v1634, %v1640
    %vm1643 = vcmask 523264
    %v1645 = vsel %vm1643, %v1618, 0
    %v1648 = vsel %vm1643, %v1619, 0
    %v1651 = vsel %vm1643, %v1620, 0
    %v1654 = vsel %vm1643, %v1621, 0
    %v1657 = vsel %vm1643, %v1622, 0
    %v1660 = vsel %vm1643, %v1623, 0
    %v1663 = vsel %vm1643, %v1624, 0
    %v1666 = vsel %vm1643, %v1625, 0
    %1668 = vmatprep.subr.mxu0 0.0
    %1669 = vmatpush1.msra.mxu0 %v1626
    %1670 = vmatprep.subr.mxu0 0.0
    %1671 = vmatpush1.msra.mxu0 %v1627
    %1672 = vmatprep.subr.mxu0 0.0
    %1673 = vmatpush1.msra.mxu0 %v1628
    %1674 = vmatprep.subr.mxu0 0.0
    %1675 = vmatpush1.msra.mxu0 %v1629
    %1676 = vmatprep.subr.mxu0 0.0
    %1677 = vmatpush1.msra.mxu0 %v1630
    %1678 = vmatprep.subr.mxu0 0.0
    %1679 = vmatpush1.msra.mxu0 %v1631
    %1680 = vmatprep.subr.mxu0 0.0
    %1681 = vmatpush1.msra.mxu0 %v1632
    %1682 = vmatprep.subr.mxu0 0.0
    %1683 = vmatpush1.msra.mxu0 %v1633
    %1684 = vmatprep.subr.mxu0 0.0
    %1685 = vmatpush1.msra.mxu0 0.0
    %1686 = vmatprep.subr.mxu0 0.0
    %1687 = vmatpush1.msra.mxu0 0.0
    %1688 = vmatprep.subr.mxu0 0.0
    %1689 = vmatpush1.msra.mxu0 0.0
    %1690 = vmatprep.subr.mxu0 0.0
    %1691 = vmatpush1.msra.mxu0 0.0
    %1692 = vmatprep.subr.mxu0 0.0
    %1693 = vmatpush1.msra.mxu0 0.0
    %1694 = vmatprep.subr.mxu0 0.0
    %1695 = vmatpush1.msra.mxu0 0.0
    %1696 = vmatprep.subr.mxu0 0.0
    %1697 = vmatpush1.msra.mxu0 0.0
    %1698 = vmatprep.subr.mxu0 0.0
    %1699 = vmatpush1.msra.mxu0 0.0
    %1700 = vmatprep.subr.mxu0 0.0
    %1701 = vmatpush1.msra.mxu0 0.0
    %1702 = vmatprep.subr.mxu0 0.0
    %1703 = vmatpush1.msra.mxu0 0.0
    %1704 = vmatprep.subr.mxu0 0.0
    %1705 = vmatpush1.msra.mxu0 0.0
    %1706 = vmatprep.subr.mxu0 0.0
    %1707 = vmatpush1.msra.mxu0 0.0
    %1708 = vmatprep.subr.mxu0 0.0
    %1709 = vmatpush1.msra.mxu0 0.0
    %1710 = vmatprep.subr.mxu0 0.0
    %1711 = vmatpush1.msra.mxu0 0.0
    %1712 = vmatprep.subr.mxu0 0.0
    %1713 = vmatpush1.msra.mxu0 0.0
    %1714 = vmatprep.subr.mxu0 0.0
    %1715 = vmatpush1.msra.mxu0 0.0
    %1716 = vmatprep.subr.mxu0 0.0
    %1717 = vmatpush1.msra.mxu0 0.0
    %1718 = vmatprep.subr.mxu0 0.0
    %1719 = vmatpush1.msra.mxu0 0.0
    %1720 = vmatprep.subr.mxu0 0.0
    %1721 = vmatpush1.msra.mxu0 0.0
    %1722 = vmatprep.subr.mxu0 0.0
    %1723 = vmatpush1.msra.mxu0 0.0
    %1724 = vmatprep.subr.mxu0 0.0
    %1725 = vmatpush1.msra.mxu0 0.0
    %1726 = vmatprep.subr.mxu0 0.0
    %1727 = vmatpush1.msra.mxu0 0.0
    %1728 = vmatprep.subr.mxu0 0.0
    %1729 = vmatpush1.msra.mxu0 0.0
    %1730 = vmatprep.subr.mxu0 0.0
    %1731 = vmatpush1.msra.mxu0 0.0
    %1732 = vmatprep.mubr.f32.mxu0 0.0
    %1733 = vmatmul.mubr.f32.gmra.mrb[0].mxu0 %v1645
    %v1734 = vpop.f32.mrb[0].mxu0
    %v1735 = vadd.f32 %v1641, %v1734
    %v1736 = vpop.f32.mrb[0].mxu0
    %1737 = vmatprep.mubr.f32.mxu0 0.0
    %1738 = vmatmul.mubr.f32.gmra.mrb[0].mxu0 %v1648
    %v1739 = vpop.f32.mrb[0].mxu0
    %v1740 = vadd.f32 %v1641, %v1739
    %v1741 = vpop.f32.mrb[0].mxu0
    %1742 = vmatprep.mubr.f32.mxu0 0.0
    %1743 = vmatmul.mubr.f32.gmra.mrb[0].mxu0 %v1651
    %v1744 = vpop.f32.mrb[0].mxu0
    %v1745 = vadd.f32 %v1641, %v1744
    %v1746 = vpop.f32.mrb[0].mxu0
    %1747 = vmatprep.mubr.f32.mxu0 0.0
    %1748 = vmatmul.mubr.f32.gmra.mrb[0].mxu0 %v1654
    %v1749 = vpop.f32.mrb[0].mxu0
    %v1750 = vadd.f32 %v1641, %v1749
    %v1751 = vpop.f32.mrb[0].mxu0
    %1752 = vmatprep.mubr.f32.mxu0 0.0
    %1753 = vmatmul.mubr.f32.gmra.mrb[0].mxu0 %v1657
    %v1754 = vpop.f32.mrb[0].mxu0
    %v1755 = vadd.f32 %v1641, %v1754
    %v1756 = vpop.f32.mrb[0].mxu0
    %1757 = vmatprep.mubr.f32.mxu0 0.0
    %1758 = vmatmul.mubr.f32.gmra.mrb[0].mxu0 %v1660
    %v1759 = vpop.f32.mrb[0].mxu0
    %v1760 = vadd.f32 %v1641, %v1759
    %v1761 = vpop.f32.mrb[0].mxu0
    %1762 = vmatprep.mubr.f32.mxu0 0.0
    %1763 = vmatmul.mubr.f32.gmra.mrb[0].mxu0 %v1663
    %v1764 = vpop.f32.mrb[0].mxu0
    %v1765 = vadd.f32 %v1641, %v1764
    %v1766 = vpop.f32.mrb[0].mxu0
    %1767 = vmatprep.mubr.f32.mxu0 0.0
    %1768 = vmatmul.mubr.f32.gmra.mrb[0].mxu0 %v1666
    %v1769 = vpop.f32.mrb[0].mxu0
    %v1770 = vadd.f32 %v1641, %v1769
    %v1771 = vpop.f32.mrb[0].mxu0
    %1772 = vdwg.mxu0
    %1775 = vrot.lane.b32.xlu0 %v1610, 32
    %v1776 = vpop.permute.xlu0 %1775
    %1777 = vrot.lane.b32.xlu0 %v1617, 32
    %v1778 = vpop.permute.xlu0 %1777
    %v1781 = vmul.f32 %v1735, %v1776
    %v1782 = vmul.f32 %v1740, %v1778
    %v1783 = vsel %vm65, %v1781, 0.0
    %1784 = vadd.xlane.f32.xlu0 %v1783
    %v1785 = vpop.xlane.xlu0 %1784
    %v1786 = vsel %vm65, %v1782, 0.0
    %1787 = vadd.xlane.f32.xlu0 %v1786
    %v1788 = vpop.xlane.xlu0 %1787
    %vm1789 = vcmp.gt.f32.partialorder %v1635, 0.0
    %vm1790 = vcmp.gt.f32.partialorder %v1636, 0.0
    %v1791 = vsel %vm1789, %v1785, -1e+09
    %v1792 = vsel %vm1790, %v1788, -1e+09
    %v1793 = vmul.f32 %v1745, %v1776
    %v1794 = vmul.f32 %v1750, %v1778
    %v1795 = vsel %vm65, %v1793, 0.0
    %1796 = vadd.xlane.f32.xlu0 %v1795
    %v1797 = vpop.xlane.xlu0 %1796
    %v1798 = vsel %vm65, %v1794, 0.0
    %1799 = vadd.xlane.f32.xlu0 %v1798
    %v1800 = vpop.xlane.xlu0 %1799
    %v1801 = vsel %vm1789, %v1797, -1e+09
    %v1802 = vsel %vm1790, %v1800, -1e+09
    %v1803 = vmul.f32 %v1755, %v1776
    %v1804 = vmul.f32 %v1760, %v1778
    %v1805 = vsel %vm65, %v1803, 0.0
    %1806 = vadd.xlane.f32.xlu0 %v1805
    %v1807 = vpop.xlane.xlu0 %1806
    %v1808 = vsel %vm65, %v1804, 0.0
    %1809 = vadd.xlane.f32.xlu0 %v1808
    %v1810 = vpop.xlane.xlu0 %1809
    %v1811 = vsel %vm1789, %v1807, -1e+09
    %v1812 = vsel %vm1790, %v1810, -1e+09
    %v1813 = vmul.f32 %v1765, %v1776
    %v1814 = vmul.f32 %v1770, %v1778
    %v1815 = vsel %vm65, %v1813, 0.0
    %1816 = vadd.xlane.f32.xlu0 %v1815
    %v1817 = vpop.xlane.xlu0 %1816
    %v1818 = vsel %vm65, %v1814, 0.0
    %1819 = vadd.xlane.f32.xlu0 %v1818
    %v1820 = vpop.xlane.xlu0 %1819
    %v1821 = vsel %vm1789, %v1817, -1e+09
    %v1822 = vsel %vm1790, %v1820, -1e+09
    %1825 = vrot.lane.b32.xlu0 %v1801, 127
    %v1826 = vpop.permute.xlu0 %1825
    %1827 = vrot.lane.b32.xlu0 %v1802, 127
    %v1828 = vpop.permute.xlu0 %1827
    %v1831 = vmax.f32 %v1791, %v1826
    %v1832 = vmax.f32 %v1792, %v1828
    %1835 = vrot.lane.b32.xlu0 %v1811, 126
    %v1836 = vpop.permute.xlu0 %1835
    %1837 = vrot.lane.b32.xlu0 %v1812, 126
    %v1838 = vpop.permute.xlu0 %1837
    %v1841 = vmax.f32 %v1831, %v1836
    %v1842 = vmax.f32 %v1832, %v1838
    %1845 = vrot.lane.b32.xlu0 %v1821, 125
    %v1846 = vpop.permute.xlu0 %1845
    %1847 = vrot.lane.b32.xlu0 %v1822, 125
    %v1848 = vpop.permute.xlu0 %1847
    %v1851 = vmax.f32 %v1841, %v1846
    %v1852 = vmax.f32 %v1842, %v1848
    %v1853 = vsub.f32 %v1791, %v1851
    %v1854 = vsub.f32 %v1792, %v1852
    %v1855 = vmul.f32 %v1853, 1.442695
    %v1856 = vpow.pop %v1855
    %v1857 = vmul.f32 %v1854, 1.442695
    %v1858 = vpow.pop %v1857
    %1861 = vrot.lane.b32.xlu0 %v1851, 1
    %v1862 = vpop.permute.xlu0 %1861
    %1863 = vrot.lane.b32.xlu0 %v1852, 1
    %v1864 = vpop.permute.xlu0 %1863
    %v1867 = vsub.f32 %v1801, %v1862
    %v1868 = vsub.f32 %v1802, %v1864
    %v1869 = vmul.f32 %v1867, 1.442695
    %v1870 = vpow.pop %v1869
    %v1871 = vmul.f32 %v1868, 1.442695
    %v1872 = vpow.pop %v1871
    %1873 = vrot.lane.b32.xlu0 %v1851, 2
    %v1874 = vpop.permute.xlu0 %1873
    %1875 = vrot.lane.b32.xlu0 %v1852, 2
    %v1876 = vpop.permute.xlu0 %1875
    %v1879 = vsub.f32 %v1811, %v1874
    %v1880 = vsub.f32 %v1812, %v1876
    %v1881 = vmul.f32 %v1879, 1.442695
    %v1882 = vpow.pop %v1881
    %v1883 = vmul.f32 %v1880, 1.442695
    %v1884 = vpow.pop %v1883
    %1885 = vrot.lane.b32.xlu0 %v1851, 3
    %v1886 = vpop.permute.xlu0 %1885
    %1887 = vrot.lane.b32.xlu0 %v1852, 3
    %v1888 = vpop.permute.xlu0 %1887
    %v1891 = vsub.f32 %v1821, %v1886
    %v1892 = vsub.f32 %v1822, %v1888
    %v1893 = vmul.f32 %v1891, 1.442695
    %v1894 = vpow.pop %v1893
    %v1895 = vmul.f32 %v1892, 1.442695
    %v1896 = vpow.pop %v1895
    %1899 = vrot.lane.b32.xlu0 %v1870, 127
    %v1900 = vpop.permute.xlu0 %1899
    %1901 = vrot.lane.b32.xlu0 %v1872, 127
    %v1902 = vpop.permute.xlu0 %1901
    %v1905 = vadd.f32 %v1856, %v1900
    %v1906 = vadd.f32 %v1858, %v1902
    %1909 = vrot.lane.b32.xlu0 %v1882, 126
    %v1910 = vpop.permute.xlu0 %1909
    %1911 = vrot.lane.b32.xlu0 %v1884, 126
    %v1912 = vpop.permute.xlu0 %1911
    %v1915 = vadd.f32 %v1905, %v1910
    %v1916 = vadd.f32 %v1906, %v1912
    %1919 = vrot.lane.b32.xlu0 %v1894, 125
    %v1920 = vpop.permute.xlu0 %1919
    %1921 = vrot.lane.b32.xlu0 %v1896, 125
    %v1922 = vpop.permute.xlu0 %1921
    %v1925 = vadd.f32 %v1915, %v1920
    %v1926 = vadd.f32 %v1916, %v1922
    %v1927 = vrcp.pop %v1925
    %v1928 = vrcp.pop %v1926
    %v1929 = vmul.f32 %v1856, %v1927
    %v1930 = vmul.f32 %v1858, %v1928
    %1932 = vset.pattern.permute.xlu0 0
    %1933 = vperm.xlu0 %1932, %v1929
    %v1934 = vpop.permute.xlu0 %1933
    %1937 = vset.pattern.permute.xlu0 0
    %1938 = vperm.xlu0 %1937, %v1930
    %v1939 = vpop.permute.xlu0 %1938
    %v1941 = vmul.f32 %v1934, %v1618
    %v1942 = vmul.f32 %v1939, %v1619
    %v1943 = vadd.f32 %v1941, 0.0
    %v1944 = vadd.f32 %v1942, 0.0
    %1947 = vrot.lane.b32.xlu0 %v1927, 1
    %v1948 = vpop.permute.xlu0 %1947
    %1949 = vrot.lane.b32.xlu0 %v1928, 1
    %v1950 = vpop.permute.xlu0 %1949
    %v1953 = vmul.f32 %v1870, %v1948
    %v1954 = vmul.f32 %v1872, %v1950
    %1956 = vset.pattern.permute.xlu0 1
    %1957 = vperm.xlu0 %1956, %v1953
    %v1958 = vpop.permute.xlu0 %1957
    %1961 = vset.pattern.permute.xlu0 1
    %1962 = vperm.xlu0 %1961, %v1954
    %v1963 = vpop.permute.xlu0 %1962
    %v1965 = vmul.f32 %v1958, %v1620
    %v1966 = vmul.f32 %v1963, %v1621
    %v1967 = vadd.f32 %v1943, %v1965
    %v1968 = vadd.f32 %v1944, %v1966
    %1969 = vrot.lane.b32.xlu0 %v1927, 2
    %v1970 = vpop.permute.xlu0 %1969
    %1971 = vrot.lane.b32.xlu0 %v1928, 2
    %v1972 = vpop.permute.xlu0 %1971
    %v1975 = vmul.f32 %v1882, %v1970
    %v1976 = vmul.f32 %v1884, %v1972
    %1978 = vset.pattern.permute.xlu0 2
    %1979 = vperm.xlu0 %1978, %v1975
    %v1980 = vpop.permute.xlu0 %1979
    %1983 = vset.pattern.permute.xlu0 2
    %1984 = vperm.xlu0 %1983, %v1976
    %v1985 = vpop.permute.xlu0 %1984
    %v1987 = vmul.f32 %v1980, %v1622
    %v1988 = vmul.f32 %v1985, %v1623
    %v1989 = vadd.f32 %v1967, %v1987
    %v1990 = vadd.f32 %v1968, %v1988
    %1991 = vrot.lane.b32.xlu0 %v1927, 3
    %v1992 = vpop.permute.xlu0 %1991
    %1993 = vrot.lane.b32.xlu0 %v1928, 3
    %v1994 = vpop.permute.xlu0 %1993
    %v1997 = vmul.f32 %v1894, %v1992
    %v1998 = vmul.f32 %v1896, %v1994
    %2000 = vset.pattern.permute.xlu0 3
    %2001 = vperm.xlu0 %2000, %v1997
    %v2002 = vpop.permute.xlu0 %2001
    %2005 = vset.pattern.permute.xlu0 3
    %2006 = vperm.xlu0 %2005, %v1998
    %v2007 = vpop.permute.xlu0 %2006
    %v2009 = vmul.f32 %v2002, %v1624
    %v2010 = vmul.f32 %v2007, %v1625
    %v2011 = vadd.f32 %v1989, %v2009
    %v2012 = vadd.f32 %v1990, %v2010
    %2013 = vst.msk [vmem:[#allocation2] sm:$0xff] %vm65, %v1776
    %2014 = vst.msk [vmem:[#allocation2 + $0x8] sm:$0xff] %vm65, %v1778
    %2017 = vrot.lane.b32.xlu0 %v2011, 32
    %v2018 = vpop.permute.xlu0 %2017
    %2019 = vrot.lane.b32.xlu0 %v2012, 32
    %v2020 = vpop.permute.xlu0 %2019
    %vm2023 = vcmask 556288
    %2024 = vst.msk [vmem:[#allocation2] sm:$0xff] %vm2023, %v2018
    %2025 = vst.msk [vmem:[#allocation2 + $0x8] sm:$0xff] %vm2023, %v2020
    // Predicated region
    $region34: #{forward.1} parent=1 // pred_check
      _
    $region35: #{forward.1} parent=1 // pred_check_branch
      %2027 = sbr.rel (0) target = $region37
    $region36: #{forward.1} parent=1 // pred_region
      %s2029 = ssub.s32 256, 256
      %2030 = vsyncadd [#allocation3], %s2029
      %s2031 = sshll.u32 [#allocation2], 4
      %s2032 = int_to_ptr.vmem [resolvable:$true] %s2031
      %2037 = dma.vmem_to_hbm [thread:$0]  %s2032, 256, %s8, [#allocation3], 128, 128, 8
    $region37: #{forward.1} parent=1 // pred_fallthru
      _
    // Predicated region
    $region38: #{forward.1} parent=1 // pred_check
      _
    $region39: #{forward.1} parent=1 // pred_check_branch
      %2039 = sbr.rel (0) target = $region41
    $region40: #{forward.1} parent=1 // pred_region
      %2040 = dma.done [#allocation3], 256
    $region41: #{forward.1} parent=1 // pred_fallthru
      _
    %2041 = vsyncpa [#allocation3], 1

</llo_original>
